<compile_context>
chip_gen: v6e
topology: v6e:2x2x1
jax: 0.10.0
libtpu: 0.0.40
codegen_flags: <defaults>
</compile_context>

<pallas_src>
import functools
import math

import jax
import jax.numpy as jnp
from jax.experimental import pallas as pl
from jax.experimental.pallas import tpu as pltpu


def _fused_dilated_conv_kernel(x_ref, w_ref, o_ref, patch_ref, *, taps, cin, hf):
    """One grid step = one batch element.

    x_ref     : (1, Cin, L)    flattened padded image (VMEM)
    w_ref     : (Cout, Ktot)   block-diagonal fused weights (VMEM, grid-resident)
    o_ref     : (1, Cout, Hf)  output frame, Hf = H*Wp (lane-dense, Hf % 128 == 0)
    patch_ref : (Ktot, Hf)     im2col scratch (VMEM)
    """
    # Gather the im2col patch: each conv tap (branch, kh, kw) is a contiguous
    # static window of the flattened padded image -> no in-kernel reshapes.
    for row, shift in taps:
        patch_ref[row:row + cin, :] = x_ref[0, :, shift:shift + hf]
    # One MXU matmul for all 4 branches: (Cout, Ktot) @ (Ktot, Hf) -> (Cout, Hf)
    acc = jnp.dot(w_ref[...], patch_ref[...], preferred_element_type=jnp.float32)
    o_ref[0] = acc.astype(o_ref.dtype)


class DialatedConvPallas:
    """JAX/Pallas port of the PyTorch Dialated_Conv module (forward only)."""

    def __init__(self, in_channels, out_channels, key):
        assert out_channels % 4 == 0
        self.in_channels = in_channels
        self.out_channels = out_channels
        cq = out_channels // 4
        if out_channels in (64, 128):
            self.dilations = (1, 2, 4, 6)
            self.pad_mode = "reflect"
        else:
            self.dilations = (1, 1, 1, 1)
            self.pad_mode = "constant"  # PyTorch default zero padding

        # Deterministic weight init; PyTorch layout (O, I, kH, kW).
        keys = jax.random.split(key, 4)
        fan_in = in_channels * 9
        bound = 1.0 / math.sqrt(fan_in)
        self.w_oihw = [
            jax.random.uniform(k, (cq, in_channels, 3, 3), jnp.float32,
                               -bound, bound)
            for k in keys
        ]

        # Host-side weight prep: per-branch (cq, 9*Cin) with contraction order
        # (kh, kw, ci) matching the in-kernel patch row order, assembled into a
        # single block-diagonal (Cout, 4*9*Cin) so the whole module is one
        # matmul whose output is already channel-concatenated.
        kc = 9 * in_channels
        w_mats = [
            jnp.transpose(w, (0, 2, 3, 1)).reshape(cq, kc) for w in self.w_oihw
        ]
        wb = jnp.zeros((out_channels, 4 * kc), jnp.float32)
        for b, wm in enumerate(w_mats):
            wb = wb.at[b * cq:(b + 1) * cq, b * kc:(b + 1) * kc].set(wm)
        self.w_block = wb

    def __call__(self, x_nchw):
        N, Cin, H, W = x_nchw.shape
        assert Cin == self.in_channels
        d_max = max(self.dilations)
        if self.pad_mode == "reflect":
            assert d_max < H and d_max < W, "reflect pad needs pad < spatial dim"
            x_pad = jnp.pad(
                x_nchw, ((0, 0), (0, 0), (d_max, d_max), (d_max, d_max)),
                mode="reflect")
        else:
            x_pad = jnp.pad(
                x_nchw, ((0, 0), (0, 0), (d_max, d_max), (d_max, d_max)))

        # Lane-density padding: a few extra zero columns so Hf = H*Wp is an
        # exact multiple of 128 (unmasked vst for every patch copy and the
        # output).  Valid output columns read at most column W + 2*d_max - 1,
        # so they never see the extra zeros; the garbage lands only in the
        # discarded frame columns.
        wp0 = W + 2 * d_max
        extra_w = 0
        for e in range(128):
            if (H * (wp0 + e)) % 128 == 0:
                extra_w = e
                break
        if extra_w > 32:     # don't waste bandwidth if alignment is too costly
            extra_w = 0
        # One extra zero row so every tap's flat window stays in bounds (the
        # over-read only lands in the discarded frame columns of the last row).
        x_pad = jnp.pad(x_pad, ((0, 0), (0, 0), (0, 1), (0, extra_w)))

        Hp, Wp = H + 2 * d_max + 1, wp0 + extra_w
        L = Hp * Wp
        x_flat = x_pad.reshape(N, Cin, L)   # free minor-dim merge
        hf = H * Wp                          # matmul N dim on the lane axis
        kc = 9 * Cin
        ktot = 4 * kc
        cout = self.out_channels

        # Static tap table: (patch row, flat window start) per (branch, kh, kw).
        # Per-branch window offset = d_max - d so all branches share one pad.
        taps = []
        for b, d in enumerate(self.dilations):
            off = d_max - d
            for kh in range(3):
                for kw in range(3):
                    taps.append((
                        (b * 9 + kh * 3 + kw) * Cin,
                        (off + kh * d) * Wp + (off + kw * d),
                    ))
        taps = tuple(taps)

        w_block = self.w_block.astype(x_nchw.dtype)
        kernel = functools.partial(
            _fused_dilated_conv_kernel, taps=taps, cin=Cin, hf=hf)

        flops = 2 * N * cout * ktot * hf
        itemsize = jnp.dtype(x_nchw.dtype).itemsize
        bytes_accessed = (x_flat.size + w_block.size + N * cout * hf) * itemsize

        out_frame = pl.pallas_call(
            kernel,
            out_shape=jax.ShapeDtypeStruct((N, cout, hf), x_nchw.dtype),
            grid=(N,),
            in_specs=[
                pl.BlockSpec((1, Cin, L), lambda n: (n, 0, 0)),
                pl.BlockSpec((cout, ktot), lambda n: (0, 0)),
            ],
            out_specs=pl.BlockSpec((1, cout, hf), lambda n: (n, 0, 0)),
            scratch_shapes=[pltpu.VMEM((ktot, hf), x_nchw.dtype)],
            compiler_params=pltpu.CompilerParams(
                dimension_semantics=("parallel",)),
            cost_estimate=pl.CostEstimate(
                flops=flops, transcendentals=0, bytes_accessed=bytes_accessed),
        )(x_flat, w_block)

        # (N, Cout, H*Wp) -> (N, Cout, H, Wp) is a free reshape; drop the frame
        # padding columns.  Output is already NCHW and channel-concatenated.
        return out_frame.reshape(N, cout, H, Wp)[:, :, :, :W]


def _reference(x_nchw, module):
    """Pure-JAX reference using lax.conv_general_dilated (per-branch pad)."""
    outs = []
    mode = "reflect" if module.pad_mode == "reflect" else "constant"
    for w_oihw, d in zip(module.w_oihw, module.dilations):
        x_pad = jnp.pad(x_nchw, ((0, 0), (0, 0), (d, d), (d, d)), mode=mode)
        outs.append(
            jax.lax.conv_general_dilated(
                x_pad, w_oihw, window_strides=(1, 1), padding="VALID",
                rhs_dilation=(d, d),
                dimension_numbers=("NCHW", "OIHW", "NCHW"),
            )
        )
    return jnp.concatenate(outs, axis=1)


if __name__ == "__main__":
    key = jax.random.PRNGKey(0)
    k_x, k_w = jax.random.split(key)

    N, Cin, H, W = 2, 4, 16, 16
    Cout = 64  # triggers the dilated (1, 2, 4, 6) reflect-padded branch

    x = jax.random.normal(k_x, (N, Cin, H, W), jnp.float32)

    module = DialatedConvPallas(Cin, Cout, k_w)
    out = jax.block_until_ready(module(x))
    assert out.shape == (N, Cout, H, W), out.shape

    ref = jax.block_until_ready(_reference(x, module))
    assert jnp.allclose(out, ref, atol=1e-4, rtol=1e-4), (
        float(jnp.max(jnp.abs(out - ref)))
    )

    print("KERNEL_OK")
</pallas_src>

<mosaic_0001>
module attributes {stable_mosaic.version = 11 : i64} {
  func.func @_fused_dilated_conv_kernel(%arg0: i32, %arg1: memref<1x4x928xf32, #tpu.memory_space<vmem>>, %arg2: memref<64x144xf32, #tpu.memory_space<vmem>>, %arg3: memref<1x64x512xf32, #tpu.memory_space<vmem>>, %arg4: memref<144x512xf32, #tpu.memory_space<vmem>>) attributes {dimension_semantics = [#tpu.dimension_semantics<parallel>], iteration_bounds = array<i64: 2>, scalar_prefetch = 0 : i64, scratch_operands = 1 : i64, tpu.core_type = #tpu.core_type<tc>, window_params = [{transform_indices = @transform_0, window_bounds = array<i64: 1, 4, 928>}, {pipeline_mode = #tpu.pipeline_mode<synchronous>, transform_indices = @transform_1, window_bounds = array<i64: 64, 144>}, {transform_indices = @transform_2, window_bounds = array<i64: 1, 64, 512>}]} {
    %c0 = arith.constant 0 : index
    %c0_0 = arith.constant 0 : index
    %c165 = arith.constant 165 : index
    %0 = vector.load %arg1[%c0, %c0_0, %c165] : memref<1x4x928xf32, #tpu.memory_space<vmem>>, vector<1x4x512xf32>
    %1 = vector.shape_cast %0 : vector<1x4x512xf32> to vector<4x512xf32>
    %c0_1 = arith.constant 0 : index
    %c0_2 = arith.constant 0 : index
    %2 = vector.load %arg4[%c0_1, %c0_2] : memref<144x512xf32, #tpu.memory_space<vmem>>, vector<4x512xf32>
    tpu.vector_store %arg4[%c0_1, %c0_2], %1 {strides = array<i32>} : memref<144x512xf32, #tpu.memory_space<vmem>>, vector<4x512xf32>,
    %c0_3 = arith.constant 0 : index
    %c0_4 = arith.constant 0 : index
    %c166 = arith.constant 166 : index
    %3 = vector.load %arg1[%c0_3, %c0_4, %c166] : memref<1x4x928xf32, #tpu.memory_space<vmem>>, vector<1x4x512xf32>
    %4 = vector.shape_cast %3 : vector<1x4x512xf32> to vector<4x512xf32>
    %c4 = arith.constant 4 : index
    %c0_5 = arith.constant 0 : index
    %5 = vector.load %arg4[%c4, %c0_5] : memref<144x512xf32, #tpu.memory_space<vmem>>, vector<4x512xf32>
    tpu.vector_store %arg4[%c4, %c0_5], %4 {strides = array<i32>} : memref<144x512xf32, #tpu.memory_space<vmem>>, vector<4x512xf32>,
    %c0_6 = arith.constant 0 : index
    %c0_7 = arith.constant 0 : index
    %c167 = arith.constant 167 : index
    %6 = vector.load %arg1[%c0_6, %c0_7, %c167] : memref<1x4x928xf32, #tpu.memory_space<vmem>>, vector<1x4x512xf32>
    %7 = vector.shape_cast %6 : vector<1x4x512xf32> to vector<4x512xf32>
    %c8 = arith.constant 8 : index
    %c0_8 = arith.constant 0 : index
    %8 = vector.load %arg4[%c8, %c0_8] : memref<144x512xf32, #tpu.memory_space<vmem>>, vector<4x512xf32>
    tpu.vector_store %arg4[%c8, %c0_8], %7 {strides = array<i32>} : memref<144x512xf32, #tpu.memory_space<vmem>>, vector<4x512xf32>,
    %c0_9 = arith.constant 0 : index
    %c0_10 = arith.constant 0 : index
    %c197 = arith.constant 197 : index
    %9 = vector.load %arg1[%c0_9, %c0_10, %c197] : memref<1x4x928xf32, #tpu.memory_space<vmem>>, vector<1x4x512xf32>
    %10 = vector.shape_cast %9 : vector<1x4x512xf32> to vector<4x512xf32>
    %c12 = arith.constant 12 : index
    %c0_11 = arith.constant 0 : index
    %11 = vector.load %arg4[%c12, %c0_11] : memref<144x512xf32, #tpu.memory_space<vmem>>, vector<4x512xf32>
    tpu.vector_store %arg4[%c12, %c0_11], %10 {strides = array<i32>} : memref<144x512xf32, #tpu.memory_space<vmem>>, vector<4x512xf32>,
    %c0_12 = arith.constant 0 : index
    %c0_13 = arith.constant 0 : index
    %c198 = arith.constant 198 : index
    %12 = vector.load %arg1[%c0_12, %c0_13, %c198] : memref<1x4x928xf32, #tpu.memory_space<vmem>>, vector<1x4x512xf32>
    %13 = vector.shape_cast %12 : vector<1x4x512xf32> to vector<4x512xf32>
    %c16 = arith.constant 16 : index
    %c0_14 = arith.constant 0 : index
    %14 = vector.load %arg4[%c16, %c0_14] : memref<144x512xf32, #tpu.memory_space<vmem>>, vector<4x512xf32>
    tpu.vector_store %arg4[%c16, %c0_14], %13 {strides = array<i32>} : memref<144x512xf32, #tpu.memory_space<vmem>>, vector<4x512xf32>,
    %c0_15 = arith.constant 0 : index
    %c0_16 = arith.constant 0 : index
    %c199 = arith.constant 199 : index
    %15 = vector.load %arg1[%c0_15, %c0_16, %c199] : memref<1x4x928xf32, #tpu.memory_space<vmem>>, vector<1x4x512xf32>
    %16 = vector.shape_cast %15 : vector<1x4x512xf32> to vector<4x512xf32>
    %c20 = arith.constant 20 : index
    %c0_17 = arith.constant 0 : index
    %17 = vector.load %arg4[%c20, %c0_17] : memref<144x512xf32, #tpu.memory_space<vmem>>, vector<4x512xf32>
    tpu.vector_store %arg4[%c20, %c0_17], %16 {strides = array<i32>} : memref<144x512xf32, #tpu.memory_space<vmem>>, vector<4x512xf32>,
    %c0_18 = arith.constant 0 : index
    %c0_19 = arith.constant 0 : index
    %c229 = arith.constant 229 : index
    %18 = vector.load %arg1[%c0_18, %c0_19, %c229] : memref<1x4x928xf32, #tpu.memory_space<vmem>>, vector<1x4x512xf32>
    %19 = vector.shape_cast %18 : vector<1x4x512xf32> to vector<4x512xf32>
    %c24 = arith.constant 24 : index
    %c0_20 = arith.constant 0 : index
    %20 = vector.load %arg4[%c24, %c0_20] : memref<144x512xf32, #tpu.memory_space<vmem>>, vector<4x512xf32>
    tpu.vector_store %arg4[%c24, %c0_20], %19 {strides = array<i32>} : memref<144x512xf32, #tpu.memory_space<vmem>>, vector<4x512xf32>,
    %c0_21 = arith.constant 0 : index
    %c0_22 = arith.constant 0 : index
    %c230 = arith.constant 230 : index
    %21 = vector.load %arg1[%c0_21, %c0_22, %c230] : memref<1x4x928xf32, #tpu.memory_space<vmem>>, vector<1x4x512xf32>
    %22 = vector.shape_cast %21 : vector<1x4x512xf32> to vector<4x512xf32>
    %c28 = arith.constant 28 : index
    %c0_23 = arith.constant 0 : index
    %23 = vector.load %arg4[%c28, %c0_23] : memref<144x512xf32, #tpu.memory_space<vmem>>, vector<4x512xf32>
    tpu.vector_store %arg4[%c28, %c0_23], %22 {strides = array<i32>} : memref<144x512xf32, #tpu.memory_space<vmem>>, vector<4x512xf32>,
    %c0_24 = arith.constant 0 : index
    %c0_25 = arith.constant 0 : index
    %c231 = arith.constant 231 : index
    %24 = vector.load %arg1[%c0_24, %c0_25, %c231] : memref<1x4x928xf32, #tpu.memory_space<vmem>>, vector<1x4x512xf32>
    %25 = vector.shape_cast %24 : vector<1x4x512xf32> to vector<4x512xf32>
    %c32 = arith.constant 32 : index
    %c0_26 = arith.constant 0 : index
    %26 = vector.load %arg4[%c32, %c0_26] : memref<144x512xf32, #tpu.memory_space<vmem>>, vector<4x512xf32>
    tpu.vector_store %arg4[%c32, %c0_26], %25 {strides = array<i32>} : memref<144x512xf32, #tpu.memory_space<vmem>>, vector<4x512xf32>,
    %c0_27 = arith.constant 0 : index
    %c0_28 = arith.constant 0 : index
    %c132 = arith.constant 132 : index
    %27 = vector.load %arg1[%c0_27, %c0_28, %c132] : memref<1x4x928xf32, #tpu.memory_space<vmem>>, vector<1x4x512xf32>
    %28 = vector.shape_cast %27 : vector<1x4x512xf32> to vector<4x512xf32>
    %c36 = arith.constant 36 : index
    %c0_29 = arith.constant 0 : index
    %29 = vector.load %arg4[%c36, %c0_29] : memref<144x512xf32, #tpu.memory_space<vmem>>, vector<4x512xf32>
    tpu.vector_store %arg4[%c36, %c0_29], %28 {strides = array<i32>} : memref<144x512xf32, #tpu.memory_space<vmem>>, vector<4x512xf32>,
    %c0_30 = arith.constant 0 : index
    %c0_31 = arith.constant 0 : index
    %c134 = arith.constant 134 : index
    %30 = vector.load %arg1[%c0_30, %c0_31, %c134] : memref<1x4x928xf32, #tpu.memory_space<vmem>>, vector<1x4x512xf32>
    %31 = vector.shape_cast %30 : vector<1x4x512xf32> to vector<4x512xf32>
    %c40 = arith.constant 40 : index
    %c0_32 = arith.constant 0 : index
    %32 = vector.load %arg4[%c40, %c0_32] : memref<144x512xf32, #tpu.memory_space<vmem>>, vector<4x512xf32>
    tpu.vector_store %arg4[%c40, %c0_32], %31 {strides = array<i32>} : memref<144x512xf32, #tpu.memory_space<vmem>>, vector<4x512xf32>,
    %c0_33 = arith.constant 0 : index
    %c0_34 = arith.constant 0 : index
    %c136 = arith.constant 136 : index
    %33 = vector.load %arg1[%c0_33, %c0_34, %c136] : memref<1x4x928xf32, #tpu.memory_space<vmem>>, vector<1x4x512xf32>
    %34 = vector.shape_cast %33 : vector<1x4x512xf32> to vector<4x512xf32>
    %c44 = arith.constant 44 : index
    %c0_35 = arith.constant 0 : index
    %35 = vector.load %arg4[%c44, %c0_35] : memref<144x512xf32, #tpu.memory_space<vmem>>, vector<4x512xf32>
    tpu.vector_store %arg4[%c44, %c0_35], %34 {strides = array<i32>} : memref<144x512xf32, #tpu.memory_space<vmem>>, vector<4x512xf32>,
    %c0_36 = arith.constant 0 : index
    %c0_37 = arith.constant 0 : index
    %c196 = arith.constant 196 : index
    %36 = vector.load %arg1[%c0_36, %c0_37, %c196] : memref<1x4x928xf32, #tpu.memory_space<vmem>>, vector<1x4x512xf32>
    %37 = vector.shape_cast %36 : vector<1x4x512xf32> to vector<4x512xf32>
    %c48 = arith.constant 48 : index
    %c0_38 = arith.constant 0 : index
    %38 = vector.load %arg4[%c48, %c0_38] : memref<144x512xf32, #tpu.memory_space<vmem>>, vector<4x512xf32>
    tpu.vector_store %arg4[%c48, %c0_38], %37 {strides = array<i32>} : memref<144x512xf32, #tpu.memory_space<vmem>>, vector<4x512xf32>,
    %c0_39 = arith.constant 0 : index
    %c0_40 = arith.constant 0 : index
    %c198_41 = arith.constant 198 : index
    %39 = vector.load %arg1[%c0_39, %c0_40, %c198_41] : memref<1x4x928xf32, #tpu.memory_space<vmem>>, vector<1x4x512xf32>
    %40 = vector.shape_cast %39 : vector<1x4x512xf32> to vector<4x512xf32>
    %c52 = arith.constant 52 : index
    %c0_42 = arith.constant 0 : index
    %41 = vector.load %arg4[%c52, %c0_42] : memref<144x512xf32, #tpu.memory_space<vmem>>, vector<4x512xf32>
    tpu.vector_store %arg4[%c52, %c0_42], %40 {strides = array<i32>} : memref<144x512xf32, #tpu.memory_space<vmem>>, vector<4x512xf32>,
    %c0_43 = arith.constant 0 : index
    %c0_44 = arith.constant 0 : index
    %c200 = arith.constant 200 : index
    %42 = vector.load %arg1[%c0_43, %c0_44, %c200] : memref<1x4x928xf32, #tpu.memory_space<vmem>>, vector<1x4x512xf32>
    %43 = vector.shape_cast %42 : vector<1x4x512xf32> to vector<4x512xf32>
    %c56 = arith.constant 56 : index
    %c0_45 = arith.constant 0 : index
    %44 = vector.load %arg4[%c56, %c0_45] : memref<144x512xf32, #tpu.memory_space<vmem>>, vector<4x512xf32>
    tpu.vector_store %arg4[%c56, %c0_45], %43 {strides = array<i32>} : memref<144x512xf32, #tpu.memory_space<vmem>>, vector<4x512xf32>,
    %c0_46 = arith.constant 0 : index
    %c0_47 = arith.constant 0 : index
    %c260 = arith.constant 260 : index
    %45 = vector.load %arg1[%c0_46, %c0_47, %c260] : memref<1x4x928xf32, #tpu.memory_space<vmem>>, vector<1x4x512xf32>
    %46 = vector.shape_cast %45 : vector<1x4x512xf32> to vector<4x512xf32>
    %c60 = arith.constant 60 : index
    %c0_48 = arith.constant 0 : index
    %47 = vector.load %arg4[%c60, %c0_48] : memref<144x512xf32, #tpu.memory_space<vmem>>, vector<4x512xf32>
    tpu.vector_store %arg4[%c60, %c0_48], %46 {strides = array<i32>} : memref<144x512xf32, #tpu.memory_space<vmem>>, vector<4x512xf32>,
    %c0_49 = arith.constant 0 : index
    %c0_50 = arith.constant 0 : index
    %c262 = arith.constant 262 : index
    %48 = vector.load %arg1[%c0_49, %c0_50, %c262] : memref<1x4x928xf32, #tpu.memory_space<vmem>>, vector<1x4x512xf32>
    %49 = vector.shape_cast %48 : vector<1x4x512xf32> to vector<4x512xf32>
    %c64 = arith.constant 64 : index
    %c0_51 = arith.constant 0 : index
    %50 = vector.load %arg4[%c64, %c0_51] : memref<144x512xf32, #tpu.memory_space<vmem>>, vector<4x512xf32>
    tpu.vector_store %arg4[%c64, %c0_51], %49 {strides = array<i32>} : memref<144x512xf32, #tpu.memory_space<vmem>>, vector<4x512xf32>,
    %c0_52 = arith.constant 0 : index
    %c0_53 = arith.constant 0 : index
    %c264 = arith.constant 264 : index
    %51 = vector.load %arg1[%c0_52, %c0_53, %c264] : memref<1x4x928xf32, #tpu.memory_space<vmem>>, vector<1x4x512xf32>
    %52 = vector.shape_cast %51 : vector<1x4x512xf32> to vector<4x512xf32>
    %c68 = arith.constant 68 : index
    %c0_54 = arith.constant 0 : index
    %53 = vector.load %arg4[%c68, %c0_54] : memref<144x512xf32, #tpu.memory_space<vmem>>, vector<4x512xf32>
    tpu.vector_store %arg4[%c68, %c0_54], %52 {strides = array<i32>} : memref<144x512xf32, #tpu.memory_space<vmem>>, vector<4x512xf32>,
    %c0_55 = arith.constant 0 : index
    %c0_56 = arith.constant 0 : index
    %c66 = arith.constant 66 : index
    %54 = vector.load %arg1[%c0_55, %c0_56, %c66] : memref<1x4x928xf32, #tpu.memory_space<vmem>>, vector<1x4x512xf32>
    %55 = vector.shape_cast %54 : vector<1x4x512xf32> to vector<4x512xf32>
    %c72 = arith.constant 72 : index
    %c0_57 = arith.constant 0 : index
    %56 = vector.load %arg4[%c72, %c0_57] : memref<144x512xf32, #tpu.memory_space<vmem>>, vector<4x512xf32>
    tpu.vector_store %arg4[%c72, %c0_57], %55 {strides = array<i32>} : memref<144x512xf32, #tpu.memory_space<vmem>>, vector<4x512xf32>,
    %c0_58 = arith.constant 0 : index
    %c0_59 = arith.constant 0 : index
    %c70 = arith.constant 70 : index
    %57 = vector.load %arg1[%c0_58, %c0_59, %c70] : memref<1x4x928xf32, #tpu.memory_space<vmem>>, vector<1x4x512xf32>
    %58 = vector.shape_cast %57 : vector<1x4x512xf32> to vector<4x512xf32>
    %c76 = arith.constant 76 : index
    %c0_60 = arith.constant 0 : index
    %59 = vector.load %arg4[%c76, %c0_60] : memref<144x512xf32, #tpu.memory_space<vmem>>, vector<4x512xf32>
    tpu.vector_store %arg4[%c76, %c0_60], %58 {strides = array<i32>} : memref<144x512xf32, #tpu.memory_space<vmem>>, vector<4x512xf32>,
    %c0_61 = arith.constant 0 : index
    %c0_62 = arith.constant 0 : index
    %c74 = arith.constant 74 : index
    %60 = vector.load %arg1[%c0_61, %c0_62, %c74] : memref<1x4x928xf32, #tpu.memory_space<vmem>>, vector<1x4x512xf32>
    %61 = vector.shape_cast %60 : vector<1x4x512xf32> to vector<4x512xf32>
    %c80 = arith.constant 80 : index
    %c0_63 = arith.constant 0 : index
    %62 = vector.load %arg4[%c80, %c0_63] : memref<144x512xf32, #tpu.memory_space<vmem>>, vector<4x512xf32>
    tpu.vector_store %arg4[%c80, %c0_63], %61 {strides = array<i32>} : memref<144x512xf32, #tpu.memory_space<vmem>>, vector<4x512xf32>,
    %c0_64 = arith.constant 0 : index
    %c0_65 = arith.constant 0 : index
    %c194 = arith.constant 194 : index
    %63 = vector.load %arg1[%c0_64, %c0_65, %c194] : memref<1x4x928xf32, #tpu.memory_space<vmem>>, vector<1x4x512xf32>
    %64 = vector.shape_cast %63 : vector<1x4x512xf32> to vector<4x512xf32>
    %c84 = arith.constant 84 : index
    %c0_66 = arith.constant 0 : index
    %65 = vector.load %arg4[%c84, %c0_66] : memref<144x512xf32, #tpu.memory_space<vmem>>, vector<4x512xf32>
    tpu.vector_store %arg4[%c84, %c0_66], %64 {strides = array<i32>} : memref<144x512xf32, #tpu.memory_space<vmem>>, vector<4x512xf32>,
    %c0_67 = arith.constant 0 : index
    %c0_68 = arith.constant 0 : index
    %c198_69 = arith.constant 198 : index
    %66 = vector.load %arg1[%c0_67, %c0_68, %c198_69] : memref<1x4x928xf32, #tpu.memory_space<vmem>>, vector<1x4x512xf32>
    %67 = vector.shape_cast %66 : vector<1x4x512xf32> to vector<4x512xf32>
    %c88 = arith.constant 88 : index
    %c0_70 = arith.constant 0 : index
    %68 = vector.load %arg4[%c88, %c0_70] : memref<144x512xf32, #tpu.memory_space<vmem>>, vector<4x512xf32>
    tpu.vector_store %arg4[%c88, %c0_70], %67 {strides = array<i32>} : memref<144x512xf32, #tpu.memory_space<vmem>>, vector<4x512xf32>,
    %c0_71 = arith.constant 0 : index
    %c0_72 = arith.constant 0 : index
    %c202 = arith.constant 202 : index
    %69 = vector.load %arg1[%c0_71, %c0_72, %c202] : memref<1x4x928xf32, #tpu.memory_space<vmem>>, vector<1x4x512xf32>
    %70 = vector.shape_cast %69 : vector<1x4x512xf32> to vector<4x512xf32>
    %c92 = arith.constant 92 : index
    %c0_73 = arith.constant 0 : index
    %71 = vector.load %arg4[%c92, %c0_73] : memref<144x512xf32, #tpu.memory_space<vmem>>, vector<4x512xf32>
    tpu.vector_store %arg4[%c92, %c0_73], %70 {strides = array<i32>} : memref<144x512xf32, #tpu.memory_space<vmem>>, vector<4x512xf32>,
    %c0_74 = arith.constant 0 : index
    %c0_75 = arith.constant 0 : index
    %c322 = arith.constant 322 : index
    %72 = vector.load %arg1[%c0_74, %c0_75, %c322] : memref<1x4x928xf32, #tpu.memory_space<vmem>>, vector<1x4x512xf32>
    %73 = vector.shape_cast %72 : vector<1x4x512xf32> to vector<4x512xf32>
    %c96 = arith.constant 96 : index
    %c0_76 = arith.constant 0 : index
    %74 = vector.load %arg4[%c96, %c0_76] : memref<144x512xf32, #tpu.memory_space<vmem>>, vector<4x512xf32>
    tpu.vector_store %arg4[%c96, %c0_76], %73 {strides = array<i32>} : memref<144x512xf32, #tpu.memory_space<vmem>>, vector<4x512xf32>,
    %c0_77 = arith.constant 0 : index
    %c0_78 = arith.constant 0 : index
    %c326 = arith.constant 326 : index
    %75 = vector.load %arg1[%c0_77, %c0_78, %c326] : memref<1x4x928xf32, #tpu.memory_space<vmem>>, vector<1x4x512xf32>
    %76 = vector.shape_cast %75 : vector<1x4x512xf32> to vector<4x512xf32>
    %c100 = arith.constant 100 : index
    %c0_79 = arith.constant 0 : index
    %77 = vector.load %arg4[%c100, %c0_79] : memref<144x512xf32, #tpu.memory_space<vmem>>, vector<4x512xf32>
    tpu.vector_store %arg4[%c100, %c0_79], %76 {strides = array<i32>} : memref<144x512xf32, #tpu.memory_space<vmem>>, vector<4x512xf32>,
    %c0_80 = arith.constant 0 : index
    %c0_81 = arith.constant 0 : index
    %c330 = arith.constant 330 : index
    %78 = vector.load %arg1[%c0_80, %c0_81, %c330] : memref<1x4x928xf32, #tpu.memory_space<vmem>>, vector<1x4x512xf32>
    %79 = vector.shape_cast %78 : vector<1x4x512xf32> to vector<4x512xf32>
    %c104 = arith.constant 104 : index
    %c0_82 = arith.constant 0 : index
    %80 = vector.load %arg4[%c104, %c0_82] : memref<144x512xf32, #tpu.memory_space<vmem>>, vector<4x512xf32>
    tpu.vector_store %arg4[%c104, %c0_82], %79 {strides = array<i32>} : memref<144x512xf32, #tpu.memory_space<vmem>>, vector<4x512xf32>,
    %c0_83 = arith.constant 0 : index
    %c0_84 = arith.constant 0 : index
    %c0_85 = arith.constant 0 : index
    %81 = vector.load %arg1[%c0_83, %c0_84, %c0_85] : memref<1x4x928xf32, #tpu.memory_space<vmem>>, vector<1x4x512xf32>
    %82 = vector.shape_cast %81 : vector<1x4x512xf32> to vector<4x512xf32>
    %c108 = arith.constant 108 : index
    %c0_86 = arith.constant 0 : index
    %83 = vector.load %arg4[%c108, %c0_86] : memref<144x512xf32, #tpu.memory_space<vmem>>, vector<4x512xf32>
    tpu.vector_store %arg4[%c108, %c0_86], %82 {strides = array<i32>} : memref<144x512xf32, #tpu.memory_space<vmem>>, vector<4x512xf32>,
    %c0_87 = arith.constant 0 : index
    %c0_88 = arith.constant 0 : index
    %c6 = arith.constant 6 : index
    %84 = vector.load %arg1[%c0_87, %c0_88, %c6] : memref<1x4x928xf32, #tpu.memory_space<vmem>>, vector<1x4x512xf32>
    %85 = vector.shape_cast %84 : vector<1x4x512xf32> to vector<4x512xf32>
    %c112 = arith.constant 112 : index
    %c0_89 = arith.constant 0 : index
    %86 = vector.load %arg4[%c112, %c0_89] : memref<144x512xf32, #tpu.memory_space<vmem>>, vector<4x512xf32>
    tpu.vector_store %arg4[%c112, %c0_89], %85 {strides = array<i32>} : memref<144x512xf32, #tpu.memory_space<vmem>>, vector<4x512xf32>,
    %c0_90 = arith.constant 0 : index
    %c0_91 = arith.constant 0 : index
    %c12_92 = arith.constant 12 : index
    %87 = vector.load %arg1[%c0_90, %c0_91, %c12_92] : memref<1x4x928xf32, #tpu.memory_space<vmem>>, vector<1x4x512xf32>
    %88 = vector.shape_cast %87 : vector<1x4x512xf32> to vector<4x512xf32>
    %c116 = arith.constant 116 : index
    %c0_93 = arith.constant 0 : index
    %89 = vector.load %arg4[%c116, %c0_93] : memref<144x512xf32, #tpu.memory_space<vmem>>, vector<4x512xf32>
    tpu.vector_store %arg4[%c116, %c0_93], %88 {strides = array<i32>} : memref<144x512xf32, #tpu.memory_space<vmem>>, vector<4x512xf32>,
    %c0_94 = arith.constant 0 : index
    %c0_95 = arith.constant 0 : index
    %c192 = arith.constant 192 : index
    %90 = vector.load %arg1[%c0_94, %c0_95, %c192] : memref<1x4x928xf32, #tpu.memory_space<vmem>>, vector<1x4x512xf32>
    %91 = vector.shape_cast %90 : vector<1x4x512xf32> to vector<4x512xf32>
    %c120 = arith.constant 120 : index
    %c0_96 = arith.constant 0 : index
    %92 = vector.load %arg4[%c120, %c0_96] : memref<144x512xf32, #tpu.memory_space<vmem>>, vector<4x512xf32>
    tpu.vector_store %arg4[%c120, %c0_96], %91 {strides = array<i32>} : memref<144x512xf32, #tpu.memory_space<vmem>>, vector<4x512xf32>,
    %c0_97 = arith.constant 0 : index
    %c0_98 = arith.constant 0 : index
    %c198_99 = arith.constant 198 : index
    %93 = vector.load %arg1[%c0_97, %c0_98, %c198_99] : memref<1x4x928xf32, #tpu.memory_space<vmem>>, vector<1x4x512xf32>
    %94 = vector.shape_cast %93 : vector<1x4x512xf32> to vector<4x512xf32>
    %c124 = arith.constant 124 : index
    %c0_100 = arith.constant 0 : index
    %95 = vector.load %arg4[%c124, %c0_100] : memref<144x512xf32, #tpu.memory_space<vmem>>, vector<4x512xf32>
    tpu.vector_store %arg4[%c124, %c0_100], %94 {strides = array<i32>} : memref<144x512xf32, #tpu.memory_space<vmem>>, vector<4x512xf32>,
    %c0_101 = arith.constant 0 : index
    %c0_102 = arith.constant 0 : index
    %c204 = arith.constant 204 : index
    %96 = vector.load %arg1[%c0_101, %c0_102, %c204] : memref<1x4x928xf32, #tpu.memory_space<vmem>>, vector<1x4x512xf32>
    %97 = vector.shape_cast %96 : vector<1x4x512xf32> to vector<4x512xf32>
    %c128 = arith.constant 128 : index
    %c0_103 = arith.constant 0 : index
    %98 = vector.load %arg4[%c128, %c0_103] : memref<144x512xf32, #tpu.memory_space<vmem>>, vector<4x512xf32>
    tpu.vector_store %arg4[%c128, %c0_103], %97 {strides = array<i32>} : memref<144x512xf32, #tpu.memory_space<vmem>>, vector<4x512xf32>,
    %c0_104 = arith.constant 0 : index
    %c0_105 = arith.constant 0 : index
    %c384 = arith.constant 384 : index
    %99 = vector.load %arg1[%c0_104, %c0_105, %c384] : memref<1x4x928xf32, #tpu.memory_space<vmem>>, vector<1x4x512xf32>
    %100 = vector.shape_cast %99 : vector<1x4x512xf32> to vector<4x512xf32>
    %c132_106 = arith.constant 132 : index
    %c0_107 = arith.constant 0 : index
    %101 = vector.load %arg4[%c132_106, %c0_107] : memref<144x512xf32, #tpu.memory_space<vmem>>, vector<4x512xf32>
    tpu.vector_store %arg4[%c132_106, %c0_107], %100 {strides = array<i32>} : memref<144x512xf32, #tpu.memory_space<vmem>>, vector<4x512xf32>,
    %c0_108 = arith.constant 0 : index
    %c0_109 = arith.constant 0 : index
    %c390 = arith.constant 390 : index
    %102 = vector.load %arg1[%c0_108, %c0_109, %c390] : memref<1x4x928xf32, #tpu.memory_space<vmem>>, vector<1x4x512xf32>
    %103 = vector.shape_cast %102 : vector<1x4x512xf32> to vector<4x512xf32>
    %c136_110 = arith.constant 136 : index
    %c0_111 = arith.constant 0 : index
    %104 = vector.load %arg4[%c136_110, %c0_111] : memref<144x512xf32, #tpu.memory_space<vmem>>, vector<4x512xf32>
    tpu.vector_store %arg4[%c136_110, %c0_111], %103 {strides = array<i32>} : memref<144x512xf32, #tpu.memory_space<vmem>>, vector<4x512xf32>,
    %c0_112 = arith.constant 0 : index
    %c0_113 = arith.constant 0 : index
    %c396 = arith.constant 396 : index
    %105 = vector.load %arg1[%c0_112, %c0_113, %c396] : memref<1x4x928xf32, #tpu.memory_space<vmem>>, vector<1x4x512xf32>
    %106 = vector.shape_cast %105 : vector<1x4x512xf32> to vector<4x512xf32>
    %c140 = arith.constant 140 : index
    %c0_114 = arith.constant 0 : index
    %107 = vector.load %arg4[%c140, %c0_114] : memref<144x512xf32, #tpu.memory_space<vmem>>, vector<4x512xf32>
    tpu.vector_store %arg4[%c140, %c0_114], %106 {strides = array<i32>} : memref<144x512xf32, #tpu.memory_space<vmem>>, vector<4x512xf32>,
    %c0_115 = arith.constant 0 : index
    %c0_116 = arith.constant 0 : index
    %108 = vector.load %arg2[%c0_115, %c0_116] : memref<64x144xf32, #tpu.memory_space<vmem>>, vector<64x144xf32>
    %c0_117 = arith.constant 0 : index
    %c0_118 = arith.constant 0 : index
    %109 = vector.load %arg4[%c0_117, %c0_118] : memref<144x512xf32, #tpu.memory_space<vmem>>, vector<144x512xf32>
    %cst = arith.constant dense<0.000000e+00> : vector<64x512xf32>
    %110 = tpu.matmul %108, %109, %cst {dimension_numbers = #tpu.dot_dimension_numbers<[1], [0], [0], [1], [0, 0, 1, 1], [], []>} : vector<64x144xf32>, vector<144x512xf32>, vector<64x512xf32> -> vector<64x512xf32>
    %c0_119 = arith.constant 0 : index
    %c0_120 = arith.constant 0 : index
    %c0_121 = arith.constant 0 : index
    %111 = vector.load %arg3[%c0_119, %c0_120, %c0_121] : memref<1x64x512xf32, #tpu.memory_space<vmem>>, vector<1x64x512xf32>
    %112 = vector.shape_cast %111 : vector<1x64x512xf32> to vector<64x512xf32>
    %113 = vector.shape_cast %110 : vector<64x512xf32> to vector<1x64x512xf32>
    tpu.vector_store %arg3[%c0_119, %c0_120, %c0_121], %113 {strides = array<i32>} : memref<1x64x512xf32, #tpu.memory_space<vmem>>, vector<1x64x512xf32>,
    return
  }
  func.func @transform_0(%arg0: i32) -> (i32, i32, i32) {
    %c0_i32 = arith.constant 0 : i32
    %c0_i32_0 = arith.constant 0 : i32
    %c0_i32_1 = arith.constant 0 : i32
    return %arg0, %c0_i32, %c0_i32_0 : i32, i32, i32
  }
  func.func @transform_1(%arg0: i32) -> (i32, i32) {
    %c0_i32 = arith.constant 0 : i32
    %c0_i32_0 = arith.constant 0 : i32
    %c0_i32_1 = arith.constant 0 : i32
    return %c0_i32, %c0_i32_0 : i32, i32
  }
  func.func @transform_2(%arg0: i32) -> (i32, i32, i32) {
    %c0_i32 = arith.constant 0 : i32
    %c0_i32_0 = arith.constant 0 : i32
    %c0_i32_1 = arith.constant 0 : i32
    return %arg0, %c0_i32, %c0_i32_0 : i32, i32, i32
  }
}

</mosaic_0001>

<llo_original>
// kernel: tpu_custom_call.1
$region0: #{tpu_custom_call.1}
  #allocation0 [shape = 'u32[]', space=smem, size = 0x4, offset = 0x4, fixed_abs, tag = 'smem constant byte address 0x4 - core index']
  #allocation1 [shape = 'u32[144,128]{1,0:T(1,128)}', space=vmem, size = 0x12000, scoped, tag = 'internal scratch']
  #allocation2 [shape = 'f32[144,512]{1,0:T(8,128)}', space=vmem, size = 0x48000, scoped, tag = 'scratch operand']
  %s0 = inlined_call_operand.hbm [shape: f32[2,4,928], index: 0, kind: input, shape index: {}]
  %s1 = inlined_call_operand.hbm [shape: f32[64,144], index: 1, kind: input, shape index: {}]
  %s2 = inlined_call_operand.hbm [shape: f32[2,64,512], index: 2, kind: output, shape index: {}]
  %s3 = sld [smem:[#allocation0]]
  $region49: #{tpu_custom_call.1} parent=0
    _
  %s5 = ssub.s32 1, %s3
  %s6 = scalar_select 0, %s5, %s3
  $region1: #{tpu_custom_call.1} parent=0
    #allocation3 [shape = 'u8[32768]{0}', space=vmem, size = 0x8000, scoped, tag = 'input window, operand 0']
    #allocation4 [shape = 's32[2]{0}', space=sflag, size = 0x8, scoped, tag = 'scoped memory for tpu_custom_call.1']
    #allocation5 [shape = 's32[2]{0}', space=sflag, size = 0x8, scoped, tag = 'scoped memory for tpu_custom_call.1']
    #allocation6 [shape = 'u8[65536]{0}', space=vmem, size = 0x10000, scoped, tag = 'input window, operand 1, single buffered']
    #allocation7 [shape = 's32[1]{0}', space=sflag, size = 0x4, scoped, tag = 'scoped memory for tpu_custom_call.1']
    #allocation8 [shape = 'u8[262144]{0}', space=vmem, size = 0x40000, scoped, tag = 'output window, operand 0']
    %7 = vsyncpa [#allocation4], 0
    %s8 = scalar_lea.sflag [#allocation4], 1
    %9 = vsyncpa %s8, 0
    %10 = vsyncpa [#allocation7], 0
    %11 = vsyncpa [#allocation5], 0
    %s12 = scalar_lea.sflag [#allocation5], 1
    %13 = vsyncpa %s12, 0
    loop: start=0, step=1, limit=4
    $region2: #{tpu_custom_call.1} parent=1 // loop_pre_header
      _
    $region3: #{tpu_custom_call.1} parent=1 // loop_header
      %s15 = sphi 0, %s19
      %p16 = scmp.ge.s32.totalorder %s15, 4
      %s25 = sphi 0, %s27
      %s28 = sphi 0, %s25
      %s29 = sphi 0, %s28
      %s45 = sphi 0, %s29
      %s49 = sphi 0, %s49
      %s51 = sphi 0, %s49
      %s52 = sphi 0, %s51
      %s66 = sphi 0, %s52
      %s72 = sphi 0, %s74
      %s75 = sphi 0, %s72
      %s76 = sphi 0, %s75
      %s92 = sphi 0, %s76
    $region4: #{tpu_custom_call.1} parent=1 // loop_header_branch
      %18 = sbr.rel (%p16) target = $region8
    $region5: #{tpu_custom_call.1} parent=1 // loop_body
      %s20 = ssub.s32 %s15, 1
      %s21 = ssub.s32 %s15, 2
      %s22 = sadd.s32 %s15, 1
      %s23 = ssub.s32 %s15, %s22
      %p24 = scmp.eq.s32.totalorder %s23, 0
      %s26 = sadd.s32 %s25, 1
      %s27 = scalar_select %p24, %s25, %s26
      %p30 = pneg %p24
      %p31 = scmp.eq.s32.totalorder %s15, 1
      %p32 = por %p30, %p31
      %p33 = scmp.ne.s32.totalorder %s25, %s28
      %p34 = scmp.eq.s32.totalorder %s15, 0
      %p35 = por %p33, %p34
      %p36 = scmp.ne.s32.totalorder %s25, %s28
      %p37 = scmp.eq.s32.totalorder %s20, 1
      %p38 = por %p36, %p37
      %p39 = scmp.ne.s32.totalorder %s28, %s29
      %p40 = scmp.eq.s32.totalorder %s20, 0
      %p41 = por %p39, %p40
      %p42 = scmp.ne.s32.totalorder %s28, %s29
      %p43 = scmp.eq.s32.totalorder %s21, 1
      %p44 = por %p42, %p43
      %p46 = scmp.ne.s32.totalorder %s29, %s45
      %p47 = scmp.eq.s32.totalorder %s21, 0
      %p48 = por %p46, %p47
      %s50 = sadd.s32 %s49, 1
      %p53 = scmp.eq.s32.totalorder %s15, 1
      %p54 = scmp.ne.s32.totalorder %s49, %s51
      %p55 = scmp.eq.s32.totalorder %s15, 0
      %p56 = por %p54, %p55
      %p57 = scmp.ne.s32.totalorder %s49, %s51
      %p58 = scmp.eq.s32.totalorder %s20, 1
      %p59 = por %p57, %p58
      %p60 = scmp.ne.s32.totalorder %s51, %s52
      %p61 = scmp.eq.s32.totalorder %s20, 0
      %p62 = por %p60, %p61
      %p63 = scmp.ne.s32.totalorder %s51, %s52
      %p64 = scmp.eq.s32.totalorder %s21, 1
      %p65 = por %p63, %p64
      %p67 = scmp.ne.s32.totalorder %s52, %s66
      %p68 = scmp.eq.s32.totalorder %s21, 0
      %p69 = por %p67, %p68
      %s70 = ssub.s32 %s15, %s22
      %p71 = scmp.eq.s32.totalorder %s70, 0
      %s73 = sadd.s32 %s72, 1
      %s74 = scalar_select %p71, %s72, %s73
      %p77 = pneg %p71
      %p78 = scmp.eq.s32.totalorder %s15, 1
      %p79 = por %p77, %p78
      %p80 = scmp.ne.s32.totalorder %s72, %s75
      %p81 = scmp.eq.s32.totalorder %s15, 0
      %p82 = por %p80, %p81
      %p83 = scmp.ne.s32.totalorder %s72, %s75
      %p84 = scmp.eq.s32.totalorder %s20, 1
      %p85 = por %p83, %p84
      %p86 = scmp.ne.s32.totalorder %s75, %s76
      %p87 = scmp.eq.s32.totalorder %s20, 0
      %p88 = por %p86, %p87
      %p89 = scmp.ne.s32.totalorder %s75, %s76
      %p90 = scmp.eq.s32.totalorder %s21, 1
      %p91 = por %p89, %p90
      %p93 = scmp.ne.s32.totalorder %s76, %s92
      %p94 = scmp.eq.s32.totalorder %s21, 0
      %p95 = por %p93, %p94
      %p96 = scmp.le.s32.totalorder 1, %s15
      %p97 = scmp.lt.s32.totalorder %s15, 3
      %p98 = pnand %p96, %p97
      %p99 = pneg %p98
      // Predicated region
      $region9: #{tpu_custom_call.1} parent=5 // pred_check
        _
      $region10: #{tpu_custom_call.1} parent=5 // pred_check_branch
        %101 = sbr.rel (%p98) target = $region12
      $region11: #{tpu_custom_call.1} parent=5 // pred_region
        %s102 = ssub.s32 %s15, 1
        // Predicated region
        $region13: #{tpu_custom_call.1} parent=11 // pred_check
          %p103 = pneg %p62
        $region14: #{tpu_custom_call.1} parent=11 // pred_check_branch
          %105 = sbr.rel (%p103) target = $region16
        $region15: #{tpu_custom_call.1} parent=11 // pred_region
          %s107 = ssub.s32 2048, 2048
          %108 = vsyncadd [#allocation7], %s107
          %s109 = sshll.u32 [#allocation6], 4
          %s110 = int_to_ptr.vmem [resolvable:$true] %s109
          %115 = dma.hbm_to_vmem [thread:$0]  %s1, 2048, %s110, [#allocation7], 256, 256, 16
        $region16: #{tpu_custom_call.1} parent=11 // pred_fallthru
          _
      $region12: #{tpu_custom_call.1} parent=5 // pred_fallthru
        _
      %p116 = scmp.lt.s32.totalorder %s15, 2
      // Predicated region
      $region17: #{tpu_custom_call.1} parent=5 // pred_check
        %p117 = pneg %p116
      $region18: #{tpu_custom_call.1} parent=5 // pred_check_branch
        %119 = sbr.rel (%p117) target = $region20
      $region19: #{tpu_custom_call.1} parent=5 // pred_region
        // Predicated region
        $region21: #{tpu_custom_call.1} parent=19 // pred_check
          %p120 = pneg %p35
        $region22: #{tpu_custom_call.1} parent=19 // pred_check_branch
          %122 = sbr.rel (%p120) target = $region24
        $region23: #{tpu_custom_call.1} parent=19 // pred_region
          %s123 = sand.u32 %s25, 1
          %s124 = scalar_lea.sflag [#allocation4], %s123
          %s125 = sand.u32 %s25, 1
          %s126 = smul.addr %s125, 32
          %s127 = scalar_lea.vmem [#allocation3], %s126
          %s129 = ssub.s32 512, 512
          %130 = vsyncadd %s124, %s129
          %s131 = smul.addr %s15, 8
          %s132 = smul.addr %s131, 64
          %s133 = scalar_lea.hbm %s0, %s132
          %s135 = sshll.u32 %s127, 4
          %s136 = int_to_ptr.vmem [resolvable:$true] %s135
          %138 = dma.hbm_to_vmem [thread:$0]  %s133, 512, %s136, %s124
        $region24: #{tpu_custom_call.1} parent=19 // pred_fallthru
          _
      $region20: #{tpu_custom_call.1} parent=5 // pred_fallthru
        _
      %p139 = scmp.le.s32.totalorder 1, %s15
      %p140 = scmp.lt.s32.totalorder %s15, 3
      %p141 = pnand %p139, %p140
      %p142 = pneg %p141
      // Predicated region
      $region25: #{tpu_custom_call.1} parent=5 // pred_check
        _
      $region26: #{tpu_custom_call.1} parent=5 // pred_check_branch
        %144 = sbr.rel (%p141) target = $region28
      $region27: #{tpu_custom_call.1} parent=5 // pred_region
        %s145 = ssub.s32 %s15, 1
        %s146 = sand.u32 %s28, 1
        %s147 = scalar_lea.sflag [#allocation4], %s146
        %s148 = sand.u32 %s28, 1
        %s149 = smul.addr %s148, 32
        %s150 = scalar_lea.vmem [#allocation3], %s149
        // Predicated region
        $region29: #{tpu_custom_call.1} parent=27 // pred_check
          %p151 = pneg %p41
        $region30: #{tpu_custom_call.1} parent=27 // pred_check_branch
          %153 = sbr.rel (%p151) target = $region32
        $region31: #{tpu_custom_call.1} parent=27 // pred_region
          %154 = dma.done %s147, 512
        $region32: #{tpu_custom_call.1} parent=27 // pred_fallthru
          _
        // Predicated region
        $region33: #{tpu_custom_call.1} parent=27 // pred_check
          %p155 = pneg %p62
        $region34: #{tpu_custom_call.1} parent=27 // pred_check_branch
          %157 = sbr.rel (%p155) target = $region36
        $region35: #{tpu_custom_call.1} parent=27 // pred_region
          %158 = dma.done [#allocation7], 2048
        $region36: #{tpu_custom_call.1} parent=27 // pred_fallthru
          _
        %s159 = sand.u32 %s28, 1
        %s160 = scalar_lea.sflag [#allocation4], %s159
        %s161 = sand.u32 %s28, 1
        %s162 = smul.addr %s161, 32
        %s163 = scalar_lea.vmem [#allocation3], %s162
        %p164 = pneg %p41
        %p165 = pneg %p38
        %p166 = pneg %p62
        %p167 = pneg %p59
        %p168 = pneg %p88
        %p169 = pneg %p85
        %s170 = sand.u32 %s75, 1
        %s171 = scalar_lea.sflag [#allocation5], %s170
        %s172 = sand.u32 %s75, 1
        %s173 = smul.addr %s172, 256
        %s174 = scalar_lea.vmem [#allocation8], %s173
        %v175 = vld [vmem:[%s150 + $0x4] sm:$0xff]
        %v176 = vld [vmem:[%s150 + $0xc] sm:$0xff]
        %v177 = vld [vmem:[%s150 + $0x14] sm:$0xf]
        %v181 = vcombine.high %v175, %v175
        %v182 = vcombine.high %v176, %v176
        %183 = vrot.lane.b32.xlu0 %v175, 91
        %v184 = vpop.permute.xlu0 %183
        %185 = vrot.lane.b32.xlu0 %v181, 91
        %v186 = vpop.permute.xlu0 %185
        %187 = vrot.lane.b32.xlu0 %v176, 91
        %v188 = vpop.permute.xlu0 %187
        %189 = vrot.lane.b32.xlu0 %v182, 91
        %v190 = vpop.permute.xlu0 %189
        %191 = vrot.lane.b32.xlu0 %v177, 91
        %v192 = vpop.permute.xlu0 %191
        %vm193 = vcmask 744448
        %v194 = vsel %vm193, %v184, %v186
        %v195 = vsel %vm193, %v186, %v188
        %v196 = vsel %vm193, %v188, %v190
        %v197 = vsel %vm193, %v190, %v192
        %202 = vst [vmem:[#allocation2] sm:$0xf] %v194
        %203 = vst [vmem:[#allocation2 + $0x8] sm:$0xf] %v195
        %204 = vst [vmem:[#allocation2 + $0x10] sm:$0xf] %v196
        %205 = vst [vmem:[#allocation2 + $0x18] sm:$0xf] %v197
        %v206 = vld [vmem:[%s150 + $0x4] sm:$0xff]
        %v207 = vld [vmem:[%s150 + $0xc] sm:$0xff]
        %v208 = vld [vmem:[%s150 + $0x14] sm:$0xf]
        %v212 = vcombine.low %v206, %v206
        %v213 = vcombine.low %v207, %v207
        %v214 = vcombine.low %v208, %v208
        %215 = vrot.lane.b32.xlu0 %v212, 90
        %v216 = vpop.permute.xlu0 %215
        %217 = vrot.lane.b32.xlu0 %v206, 90
        %v218 = vpop.permute.xlu0 %217
        %219 = vrot.lane.b32.xlu0 %v213, 90
        %v220 = vpop.permute.xlu0 %219
        %221 = vrot.lane.b32.xlu0 %v207, 90
        %v222 = vpop.permute.xlu0 %221
        %223 = vrot.lane.b32.xlu0 %v214, 90
        %v224 = vpop.permute.xlu0 %223
        %vm225 = vcmask 736256
        %v226 = vsel %vm225, %v216, %v218
        %v227 = vsel %vm225, %v218, %v220
        %v228 = vsel %vm225, %v220, %v222
        %v229 = vsel %vm225, %v222, %v224
        %234 = vst [vmem:[#allocation2] sm:$0xf0] %v226
        %235 = vst [vmem:[#allocation2 + $0x8] sm:$0xf0] %v227
        %236 = vst [vmem:[#allocation2 + $0x10] sm:$0xf0] %v228
        %237 = vst [vmem:[#allocation2 + $0x18] sm:$0xf0] %v229
        %v238 = vld [vmem:[%s150 + $0x4] sm:$0xff]
        %v239 = vld [vmem:[%s150 + $0xc] sm:$0xff]
        %v240 = vld [vmem:[%s150 + $0x14] sm:$0xf]
        %v244 = vcombine.high %v238, %v238
        %v245 = vcombine.high %v239, %v239
        %246 = vrot.lane.b32.xlu0 %v238, 89
        %v247 = vpop.permute.xlu0 %246
        %248 = vrot.lane.b32.xlu0 %v244, 89
        %v249 = vpop.permute.xlu0 %248
        %250 = vrot.lane.b32.xlu0 %v239, 89
        %v251 = vpop.permute.xlu0 %250
        %252 = vrot.lane.b32.xlu0 %v245, 89
        %v253 = vpop.permute.xlu0 %252
        %254 = vrot.lane.b32.xlu0 %v240, 89
        %v255 = vpop.permute.xlu0 %254
        %vm256 = vcmask 728064
        %v257 = vsel %vm256, %v247, %v249
        %v258 = vsel %vm256, %v249, %v251
        %v259 = vsel %vm256, %v251, %v253
        %v260 = vsel %vm256, %v253, %v255
        %265 = vst [vmem:[#allocation2 + $0x20] sm:$0xf] %v257
        %266 = vst [vmem:[#allocation2 + $0x28] sm:$0xf] %v258
        %267 = vst [vmem:[#allocation2 + $0x30] sm:$0xf] %v259
        %268 = vst [vmem:[#allocation2 + $0x38] sm:$0xf] %v260
        %v269 = vld [vmem:[%s150 + $0x4] sm:$0xff]
        %v270 = vld [vmem:[%s150 + $0xc] sm:$0xff]
        %v271 = vld [vmem:[%s150 + $0x14] sm:$0xf]
        %v275 = vcombine.low %v269, %v269
        %v276 = vcombine.low %v270, %v270
        %v277 = vcombine.low %v271, %v271
        %278 = vrot.lane.b32.xlu0 %v275, 59
        %v279 = vpop.permute.xlu0 %278
        %280 = vrot.lane.b32.xlu0 %v269, 59
        %v281 = vpop.permute.xlu0 %280
        %282 = vrot.lane.b32.xlu0 %v276, 59
        %v283 = vpop.permute.xlu0 %282
        %284 = vrot.lane.b32.xlu0 %v270, 59
        %v285 = vpop.permute.xlu0 %284
        %286 = vrot.lane.b32.xlu0 %v277, 59
        %v287 = vpop.permute.xlu0 %286
        %vm288 = vcmask 482304
        %v289 = vsel %vm288, %v279, %v281
        %v290 = vsel %vm288, %v281, %v283
        %v291 = vsel %vm288, %v283, %v285
        %v292 = vsel %vm288, %v285, %v287
        %297 = vst [vmem:[#allocation2 + $0x20] sm:$0xf0] %v289
        %298 = vst [vmem:[#allocation2 + $0x28] sm:$0xf0] %v290
        %299 = vst [vmem:[#allocation2 + $0x30] sm:$0xf0] %v291
        %300 = vst [vmem:[#allocation2 + $0x38] sm:$0xf0] %v292
        %v301 = vld [vmem:[%s150 + $0x4] sm:$0xff]
        %v302 = vld [vmem:[%s150 + $0xc] sm:$0xff]
        %v303 = vld [vmem:[%s150 + $0x14] sm:$0xf]
        %v307 = vcombine.high %v301, %v301
        %v308 = vcombine.high %v302, %v302
        %309 = vrot.lane.b32.xlu0 %v301, 58
        %v310 = vpop.permute.xlu0 %309
        %311 = vrot.lane.b32.xlu0 %v307, 58
        %v312 = vpop.permute.xlu0 %311
        %313 = vrot.lane.b32.xlu0 %v302, 58
        %v314 = vpop.permute.xlu0 %313
        %315 = vrot.lane.b32.xlu0 %v308, 58
        %v316 = vpop.permute.xlu0 %315
        %317 = vrot.lane.b32.xlu0 %v303, 58
        %v318 = vpop.permute.xlu0 %317
        %vm319 = vcmask 474112
        %v320 = vsel %vm319, %v310, %v312
        %v321 = vsel %vm319, %v312, %v314
        %v322 = vsel %vm319, %v314, %v316
        %v323 = vsel %vm319, %v316, %v318
        %328 = vst [vmem:[#allocation2 + $0x40] sm:$0xf] %v320
        %329 = vst [vmem:[#allocation2 + $0x48] sm:$0xf] %v321
        %330 = vst [vmem:[#allocation2 + $0x50] sm:$0xf] %v322
        %331 = vst [vmem:[#allocation2 + $0x58] sm:$0xf] %v323
        %v332 = vld [vmem:[%s150 + $0x4] sm:$0xff]
        %v333 = vld [vmem:[%s150 + $0xc] sm:$0xff]
        %v334 = vld [vmem:[%s150 + $0x14] sm:$0xf]
        %v338 = vcombine.low %v332, %v332
        %v339 = vcombine.low %v333, %v333
        %v340 = vcombine.low %v334, %v334
        %341 = vrot.lane.b32.xlu0 %v338, 57
        %v342 = vpop.permute.xlu0 %341
        %343 = vrot.lane.b32.xlu0 %v332, 57
        %v344 = vpop.permute.xlu0 %343
        %345 = vrot.lane.b32.xlu0 %v339, 57
        %v346 = vpop.permute.xlu0 %345
        %347 = vrot.lane.b32.xlu0 %v333, 57
        %v348 = vpop.permute.xlu0 %347
        %349 = vrot.lane.b32.xlu0 %v340, 57
        %v350 = vpop.permute.xlu0 %349
        %vm351 = vcmask 465920
        %v352 = vsel %vm351, %v342, %v344
        %v353 = vsel %vm351, %v344, %v346
        %v354 = vsel %vm351, %v346, %v348
        %v355 = vsel %vm351, %v348, %v350
        %360 = vst [vmem:[#allocation2 + $0x40] sm:$0xf0] %v352
        %361 = vst [vmem:[#allocation2 + $0x48] sm:$0xf0] %v353
        %362 = vst [vmem:[#allocation2 + $0x50] sm:$0xf0] %v354
        %363 = vst [vmem:[#allocation2 + $0x58] sm:$0xf0] %v355
        %v364 = vld [vmem:[%s150 + $0x4] sm:$0xff]
        %v365 = vld [vmem:[%s150 + $0xc] sm:$0xff]
        %v366 = vld [vmem:[%s150 + $0x14] sm:$0xf]
        %v370 = vcombine.high %v364, %v364
        %v371 = vcombine.high %v365, %v365
        %372 = vrot.lane.b32.xlu0 %v364, 27
        %v373 = vpop.permute.xlu0 %372
        %374 = vrot.lane.b32.xlu0 %v370, 27
        %v375 = vpop.permute.xlu0 %374
        %376 = vrot.lane.b32.xlu0 %v365, 27
        %v377 = vpop.permute.xlu0 %376
        %378 = vrot.lane.b32.xlu0 %v371, 27
        %v379 = vpop.permute.xlu0 %378
        %380 = vrot.lane.b32.xlu0 %v366, 27
        %v381 = vpop.permute.xlu0 %380
        %vm382 = vcmask 220160
        %v383 = vsel %vm382, %v373, %v375
        %v384 = vsel %vm382, %v375, %v377
        %v385 = vsel %vm382, %v377, %v379
        %v386 = vsel %vm382, %v379, %v381
        %391 = vst [vmem:[#allocation2 + $0x60] sm:$0xf] %v383
        %392 = vst [vmem:[#allocation2 + $0x68] sm:$0xf] %v384
        %393 = vst [vmem:[#allocation2 + $0x70] sm:$0xf] %v385
        %394 = vst [vmem:[#allocation2 + $0x78] sm:$0xf] %v386
        %v395 = vld [vmem:[%s150 + $0x4] sm:$0xff]
        %v396 = vld [vmem:[%s150 + $0xc] sm:$0xff]
        %v397 = vld [vmem:[%s150 + $0x14] sm:$0xf]
        %v401 = vcombine.low %v395, %v395
        %v402 = vcombine.low %v396, %v396
        %v403 = vcombine.low %v397, %v397
        %404 = vrot.lane.b32.xlu0 %v401, 26
        %v405 = vpop.permute.xlu0 %404
        %406 = vrot.lane.b32.xlu0 %v395, 26
        %v407 = vpop.permute.xlu0 %406
        %408 = vrot.lane.b32.xlu0 %v402, 26
        %v409 = vpop.permute.xlu0 %408
        %410 = vrot.lane.b32.xlu0 %v396, 26
        %v411 = vpop.permute.xlu0 %410
        %412 = vrot.lane.b32.xlu0 %v403, 26
        %v413 = vpop.permute.xlu0 %412
        %vm414 = vcmask 211968
        %v415 = vsel %vm414, %v405, %v407
        %v416 = vsel %vm414, %v407, %v409
        %v417 = vsel %vm414, %v409, %v411
        %v418 = vsel %vm414, %v411, %v413
        %423 = vst [vmem:[#allocation2 + $0x60] sm:$0xf0] %v415
        %424 = vst [vmem:[#allocation2 + $0x68] sm:$0xf0] %v416
        %425 = vst [vmem:[#allocation2 + $0x70] sm:$0xf0] %v417
        %426 = vst [vmem:[#allocation2 + $0x78] sm:$0xf0] %v418
        %v427 = vld [vmem:[%s150 + $0x4] sm:$0xff]
        %v428 = vld [vmem:[%s150 + $0xc] sm:$0xff]
        %v429 = vld [vmem:[%s150 + $0x14] sm:$0xf]
        %v433 = vcombine.high %v427, %v427
        %v434 = vcombine.high %v428, %v428
        %435 = vrot.lane.b32.xlu0 %v427, 25
        %v436 = vpop.permute.xlu0 %435
        %437 = vrot.lane.b32.xlu0 %v433, 25
        %v438 = vpop.permute.xlu0 %437
        %439 = vrot.lane.b32.xlu0 %v428, 25
        %v440 = vpop.permute.xlu0 %439
        %441 = vrot.lane.b32.xlu0 %v434, 25
        %v442 = vpop.permute.xlu0 %441
        %443 = vrot.lane.b32.xlu0 %v429, 25
        %v444 = vpop.permute.xlu0 %443
        %vm445 = vcmask 203776
        %v446 = vsel %vm445, %v436, %v438
        %v447 = vsel %vm445, %v438, %v440
        %v448 = vsel %vm445, %v440, %v442
        %v449 = vsel %vm445, %v442, %v444
        %454 = vst [vmem:[#allocation2 + $0x80] sm:$0xf] %v446
        %455 = vst [vmem:[#allocation2 + $0x88] sm:$0xf] %v447
        %456 = vst [vmem:[#allocation2 + $0x90] sm:$0xf] %v448
        %457 = vst [vmem:[#allocation2 + $0x98] sm:$0xf] %v449
        %v458 = vld [vmem:[%s150 + $0x4] sm:$0xff]
        %v459 = vld [vmem:[%s150 + $0xc] sm:$0xff]
        %v460 = vld [vmem:[%s150 + $0x14] sm:$0xf]
        %v464 = vcombine.low %v458, %v458
        %v465 = vcombine.low %v459, %v459
        %v466 = vcombine.low %v460, %v460
        %467 = vrot.lane.b32.xlu0 %v464, 124
        %v468 = vpop.permute.xlu0 %467
        %469 = vrot.lane.b32.xlu0 %v458, 124
        %v470 = vpop.permute.xlu0 %469
        %471 = vrot.lane.b32.xlu0 %v465, 124
        %v472 = vpop.permute.xlu0 %471
        %473 = vrot.lane.b32.xlu0 %v459, 124
        %v474 = vpop.permute.xlu0 %473
        %475 = vrot.lane.b32.xlu0 %v466, 124
        %v476 = vpop.permute.xlu0 %475
        %vm477 = vcmask 1014784
        %v478 = vsel %vm477, %v468, %v470
        %v479 = vsel %vm477, %v470, %v472
        %v480 = vsel %vm477, %v472, %v474
        %v481 = vsel %vm477, %v474, %v476
        %486 = vst [vmem:[#allocation2 + $0x80] sm:$0xf0] %v478
        %487 = vst [vmem:[#allocation2 + $0x88] sm:$0xf0] %v479
        %488 = vst [vmem:[#allocation2 + $0x90] sm:$0xf0] %v480
        %489 = vst [vmem:[#allocation2 + $0x98] sm:$0xf0] %v481
        %v490 = vld [vmem:[%s150 + $0x4] sm:$0xff]
        %v491 = vld [vmem:[%s150 + $0xc] sm:$0xff]
        %v492 = vld [vmem:[%s150 + $0x14] sm:$0xf]
        %v496 = vcombine.high %v490, %v490
        %v497 = vcombine.high %v491, %v491
        %498 = vrot.lane.b32.xlu0 %v490, 122
        %v499 = vpop.permute.xlu0 %498
        %500 = vrot.lane.b32.xlu0 %v496, 122
        %v501 = vpop.permute.xlu0 %500
        %502 = vrot.lane.b32.xlu0 %v491, 122
        %v503 = vpop.permute.xlu0 %502
        %504 = vrot.lane.b32.xlu0 %v497, 122
        %v505 = vpop.permute.xlu0 %504
        %506 = vrot.lane.b32.xlu0 %v492, 122
        %v507 = vpop.permute.xlu0 %506
        %vm508 = vcmask 998400
        %v509 = vsel %vm508, %v499, %v501
        %v510 = vsel %vm508, %v501, %v503
        %v511 = vsel %vm508, %v503, %v505
        %v512 = vsel %vm508, %v505, %v507
        %517 = vst [vmem:[#allocation2 + $0xa0] sm:$0xf] %v509
        %518 = vst [vmem:[#allocation2 + $0xa8] sm:$0xf] %v510
        %519 = vst [vmem:[#allocation2 + $0xb0] sm:$0xf] %v511
        %520 = vst [vmem:[#allocation2 + $0xb8] sm:$0xf] %v512
        %v521 = vld [vmem:[%s150 + $0x4] sm:$0xff]
        %v522 = vld [vmem:[%s150 + $0xc] sm:$0xff]
        %v523 = vld [vmem:[%s150 + $0x14] sm:$0xf]
        %v527 = vcombine.low %v521, %v521
        %v528 = vcombine.low %v522, %v522
        %v529 = vcombine.low %v523, %v523
        %530 = vrot.lane.b32.xlu0 %v527, 120
        %v531 = vpop.permute.xlu0 %530
        %532 = vrot.lane.b32.xlu0 %v521, 120
        %v533 = vpop.permute.xlu0 %532
        %534 = vrot.lane.b32.xlu0 %v528, 120
        %v535 = vpop.permute.xlu0 %534
        %536 = vrot.lane.b32.xlu0 %v522, 120
        %v537 = vpop.permute.xlu0 %536
        %538 = vrot.lane.b32.xlu0 %v529, 120
        %v539 = vpop.permute.xlu0 %538
        %vm540 = vcmask 982016
        %v541 = vsel %vm540, %v531, %v533
        %v542 = vsel %vm540, %v533, %v535
        %v543 = vsel %vm540, %v535, %v537
        %v544 = vsel %vm540, %v537, %v539
        %549 = vst [vmem:[#allocation2 + $0xa0] sm:$0xf0] %v541
        %550 = vst [vmem:[#allocation2 + $0xa8] sm:$0xf0] %v542
        %551 = vst [vmem:[#allocation2 + $0xb0] sm:$0xf0] %v543
        %552 = vst [vmem:[#allocation2 + $0xb8] sm:$0xf0] %v544
        %v553 = vld [vmem:[%s150 + $0x4] sm:$0xff]
        %v554 = vld [vmem:[%s150 + $0xc] sm:$0xff]
        %v555 = vld [vmem:[%s150 + $0x14] sm:$0xf]
        %v559 = vcombine.high %v553, %v553
        %v560 = vcombine.high %v554, %v554
        %561 = vrot.lane.b32.xlu0 %v553, 60
        %v562 = vpop.permute.xlu0 %561
        %563 = vrot.lane.b32.xlu0 %v559, 60
        %v564 = vpop.permute.xlu0 %563
        %565 = vrot.lane.b32.xlu0 %v554, 60
        %v566 = vpop.permute.xlu0 %565
        %567 = vrot.lane.b32.xlu0 %v560, 60
        %v568 = vpop.permute.xlu0 %567
        %569 = vrot.lane.b32.xlu0 %v555, 60
        %v570 = vpop.permute.xlu0 %569
        %vm571 = vcmask 490496
        %v572 = vsel %vm571, %v562, %v564
        %v573 = vsel %vm571, %v564, %v566
        %v574 = vsel %vm571, %v566, %v568
        %v575 = vsel %vm571, %v568, %v570
        %580 = vst [vmem:[#allocation2 + $0xc0] sm:$0xf] %v572
        %581 = vst [vmem:[#allocation2 + $0xc8] sm:$0xf] %v573
        %582 = vst [vmem:[#allocation2 + $0xd0] sm:$0xf] %v574
        %583 = vst [vmem:[#allocation2 + $0xd8] sm:$0xf] %v575
        %v584 = vld [vmem:[%s150 + $0x4] sm:$0xff]
        %v585 = vld [vmem:[%s150 + $0xc] sm:$0xff]
        %v586 = vld [vmem:[%s150 + $0x14] sm:$0xf]
        %v590 = vcombine.low %v584, %v584
        %v591 = vcombine.low %v585, %v585
        %v592 = vcombine.low %v586, %v586
        %593 = vrot.lane.b32.xlu0 %v590, 58
        %v594 = vpop.permute.xlu0 %593
        %595 = vrot.lane.b32.xlu0 %v584, 58
        %v596 = vpop.permute.xlu0 %595
        %597 = vrot.lane.b32.xlu0 %v591, 58
        %v598 = vpop.permute.xlu0 %597
        %599 = vrot.lane.b32.xlu0 %v585, 58
        %v600 = vpop.permute.xlu0 %599
        %601 = vrot.lane.b32.xlu0 %v592, 58
        %v602 = vpop.permute.xlu0 %601
        %v603 = vsel %vm319, %v594, %v596
        %v604 = vsel %vm319, %v596, %v598
        %v605 = vsel %vm319, %v598, %v600
        %v606 = vsel %vm319, %v600, %v602
        %611 = vst [vmem:[#allocation2 + $0xc0] sm:$0xf0] %v603
        %612 = vst [vmem:[#allocation2 + $0xc8] sm:$0xf0] %v604
        %613 = vst [vmem:[#allocation2 + $0xd0] sm:$0xf0] %v605
        %614 = vst [vmem:[#allocation2 + $0xd8] sm:$0xf0] %v606
        %v615 = vld [vmem:[%s150 + $0x4] sm:$0xff]
        %v616 = vld [vmem:[%s150 + $0xc] sm:$0xff]
        %v617 = vld [vmem:[%s150 + $0x14] sm:$0xf]
        %v621 = vcombine.high %v615, %v615
        %v622 = vcombine.high %v616, %v616
        %623 = vrot.lane.b32.xlu0 %v615, 56
        %v624 = vpop.permute.xlu0 %623
        %625 = vrot.lane.b32.xlu0 %v621, 56
        %v626 = vpop.permute.xlu0 %625
        %627 = vrot.lane.b32.xlu0 %v616, 56
        %v628 = vpop.permute.xlu0 %627
        %629 = vrot.lane.b32.xlu0 %v622, 56
        %v630 = vpop.permute.xlu0 %629
        %631 = vrot.lane.b32.xlu0 %v617, 56
        %v632 = vpop.permute.xlu0 %631
        %vm633 = vcmask 457728
        %v634 = vsel %vm633, %v624, %v626
        %v635 = vsel %vm633, %v626, %v628
        %v636 = vsel %vm633, %v628, %v630
        %v637 = vsel %vm633, %v630, %v632
        %642 = vst [vmem:[#allocation2 + $0xe0] sm:$0xf] %v634
        %643 = vst [vmem:[#allocation2 + $0xe8] sm:$0xf] %v635
        %644 = vst [vmem:[#allocation2 + $0xf0] sm:$0xf] %v636
        %645 = vst [vmem:[#allocation2 + $0xf8] sm:$0xf] %v637
        %v646 = vld [vmem:[%s150 + $0x8] sm:$0xff]
        %v647 = vld [vmem:[%s150 + $0x10] sm:$0xff]
        %v648 = vld [vmem:[%s150 + $0x18] sm:$0xf]
        %v652 = vcombine.low %v646, %v646
        %v653 = vcombine.low %v647, %v647
        %v654 = vcombine.low %v648, %v648
        %655 = vrot.lane.b32.xlu0 %v652, 124
        %v656 = vpop.permute.xlu0 %655
        %657 = vrot.lane.b32.xlu0 %v646, 124
        %v658 = vpop.permute.xlu0 %657
        %659 = vrot.lane.b32.xlu0 %v653, 124
        %v660 = vpop.permute.xlu0 %659
        %661 = vrot.lane.b32.xlu0 %v647, 124
        %v662 = vpop.permute.xlu0 %661
        %663 = vrot.lane.b32.xlu0 %v654, 124
        %v664 = vpop.permute.xlu0 %663
        %v665 = vsel %vm477, %v656, %v658
        %v666 = vsel %vm477, %v658, %v660
        %v667 = vsel %vm477, %v660, %v662
        %v668 = vsel %vm477, %v662, %v664
        %673 = vst [vmem:[#allocation2 + $0xe0] sm:$0xf0] %v665
        %674 = vst [vmem:[#allocation2 + $0xe8] sm:$0xf0] %v666
        %675 = vst [vmem:[#allocation2 + $0xf0] sm:$0xf0] %v667
        %676 = vst [vmem:[#allocation2 + $0xf8] sm:$0xf0] %v668
        %v677 = vld [vmem:[%s150 + $0x8] sm:$0xff]
        %v678 = vld [vmem:[%s150 + $0x10] sm:$0xff]
        %v679 = vld [vmem:[%s150 + $0x18] sm:$0xf]
        %v683 = vcombine.high %v677, %v677
        %v684 = vcombine.high %v678, %v678
        %685 = vrot.lane.b32.xlu0 %v677, 122
        %v686 = vpop.permute.xlu0 %685
        %687 = vrot.lane.b32.xlu0 %v683, 122
        %v688 = vpop.permute.xlu0 %687
        %689 = vrot.lane.b32.xlu0 %v678, 122
        %v690 = vpop.permute.xlu0 %689
        %691 = vrot.lane.b32.xlu0 %v684, 122
        %v692 = vpop.permute.xlu0 %691
        %693 = vrot.lane.b32.xlu0 %v679, 122
        %v694 = vpop.permute.xlu0 %693
        %v695 = vsel %vm508, %v686, %v688
        %v696 = vsel %vm508, %v688, %v690
        %v697 = vsel %vm508, %v690, %v692
        %v698 = vsel %vm508, %v692, %v694
        %703 = vst [vmem:[#allocation2 + $0x100] sm:$0xf] %v695
        %704 = vst [vmem:[#allocation2 + $0x108] sm:$0xf] %v696
        %705 = vst [vmem:[#allocation2 + $0x110] sm:$0xf] %v697
        %706 = vst [vmem:[#allocation2 + $0x118] sm:$0xf] %v698
        %v707 = vld [vmem:[%s150 + $0x8] sm:$0xff]
        %v708 = vld [vmem:[%s150 + $0x10] sm:$0xff]
        %v709 = vld [vmem:[%s150 + $0x18] sm:$0xf]
        %v713 = vcombine.low %v707, %v707
        %v714 = vcombine.low %v708, %v708
        %v715 = vcombine.low %v709, %v709
        %716 = vrot.lane.b32.xlu0 %v713, 120
        %v717 = vpop.permute.xlu0 %716
        %718 = vrot.lane.b32.xlu0 %v707, 120
        %v719 = vpop.permute.xlu0 %718
        %720 = vrot.lane.b32.xlu0 %v714, 120
        %v721 = vpop.permute.xlu0 %720
        %722 = vrot.lane.b32.xlu0 %v708, 120
        %v723 = vpop.permute.xlu0 %722
        %724 = vrot.lane.b32.xlu0 %v715, 120
        %v725 = vpop.permute.xlu0 %724
        %v726 = vsel %vm540, %v717, %v719
        %v727 = vsel %vm540, %v719, %v721
        %v728 = vsel %vm540, %v721, %v723
        %v729 = vsel %vm540, %v723, %v725
        %734 = vst [vmem:[#allocation2 + $0x100] sm:$0xf0] %v726
        %735 = vst [vmem:[#allocation2 + $0x108] sm:$0xf0] %v727
        %736 = vst [vmem:[#allocation2 + $0x110] sm:$0xf0] %v728
        %737 = vst [vmem:[#allocation2 + $0x118] sm:$0xf0] %v729
        %v738 = vld [vmem:[%s150] sm:$0xff]
        %v739 = vld [vmem:[%s150 + $0x8] sm:$0xff]
        %v740 = vld [vmem:[%s150 + $0x10] sm:$0xf]
        %v744 = vcombine.high %v738, %v738
        %v745 = vcombine.high %v739, %v739
        %746 = vrot.lane.b32.xlu0 %v738, 62
        %v747 = vpop.permute.xlu0 %746
        %748 = vrot.lane.b32.xlu0 %v744, 62
        %v749 = vpop.permute.xlu0 %748
        %750 = vrot.lane.b32.xlu0 %v739, 62
        %v751 = vpop.permute.xlu0 %750
        %752 = vrot.lane.b32.xlu0 %v745, 62
        %v753 = vpop.permute.xlu0 %752
        %754 = vrot.lane.b32.xlu0 %v740, 62
        %v755 = vpop.permute.xlu0 %754
        %vm756 = vcmask 506880
        %v757 = vsel %vm756, %v747, %v749
        %v758 = vsel %vm756, %v749, %v751
        %v759 = vsel %vm756, %v751, %v753
        %v760 = vsel %vm756, %v753, %v755
        %765 = vst [vmem:[#allocation2 + $0x120] sm:$0xf] %v757
        %766 = vst [vmem:[#allocation2 + $0x128] sm:$0xf] %v758
        %767 = vst [vmem:[#allocation2 + $0x130] sm:$0xf] %v759
        %768 = vst [vmem:[#allocation2 + $0x138] sm:$0xf] %v760
        %v769 = vld [vmem:[%s150] sm:$0xff]
        %v770 = vld [vmem:[%s150 + $0x8] sm:$0xff]
        %v771 = vld [vmem:[%s150 + $0x10] sm:$0xf]
        %v775 = vcombine.low %v769, %v769
        %v776 = vcombine.low %v770, %v770
        %v777 = vcombine.low %v771, %v771
        %778 = vrot.lane.b32.xlu0 %v775, 58
        %v779 = vpop.permute.xlu0 %778
        %780 = vrot.lane.b32.xlu0 %v769, 58
        %v781 = vpop.permute.xlu0 %780
        %782 = vrot.lane.b32.xlu0 %v776, 58
        %v783 = vpop.permute.xlu0 %782
        %784 = vrot.lane.b32.xlu0 %v770, 58
        %v785 = vpop.permute.xlu0 %784
        %786 = vrot.lane.b32.xlu0 %v777, 58
        %v787 = vpop.permute.xlu0 %786
        %v788 = vsel %vm319, %v779, %v781
        %v789 = vsel %vm319, %v781, %v783
        %v790 = vsel %vm319, %v783, %v785
        %v791 = vsel %vm319, %v785, %v787
        %796 = vst [vmem:[#allocation2 + $0x120] sm:$0xf0] %v788
        %797 = vst [vmem:[#allocation2 + $0x128] sm:$0xf0] %v789
        %798 = vst [vmem:[#allocation2 + $0x130] sm:$0xf0] %v790
        %799 = vst [vmem:[#allocation2 + $0x138] sm:$0xf0] %v791
        %v800 = vld [vmem:[%s150] sm:$0xff]
        %v801 = vld [vmem:[%s150 + $0x8] sm:$0xff]
        %v802 = vld [vmem:[%s150 + $0x10] sm:$0xf]
        %v806 = vcombine.high %v800, %v800
        %v807 = vcombine.high %v801, %v801
        %808 = vrot.lane.b32.xlu0 %v800, 54
        %v809 = vpop.permute.xlu0 %808
        %810 = vrot.lane.b32.xlu0 %v806, 54
        %v811 = vpop.permute.xlu0 %810
        %812 = vrot.lane.b32.xlu0 %v801, 54
        %v813 = vpop.permute.xlu0 %812
        %814 = vrot.lane.b32.xlu0 %v807, 54
        %v815 = vpop.permute.xlu0 %814
        %816 = vrot.lane.b32.xlu0 %v802, 54
        %v817 = vpop.permute.xlu0 %816
        %vm818 = vcmask 441344
        %v819 = vsel %vm818, %v809, %v811
        %v820 = vsel %vm818, %v811, %v813
        %v821 = vsel %vm818, %v813, %v815
        %v822 = vsel %vm818, %v815, %v817
        %827 = vst [vmem:[#allocation2 + $0x140] sm:$0xf] %v819
        %828 = vst [vmem:[#allocation2 + $0x148] sm:$0xf] %v820
        %829 = vst [vmem:[#allocation2 + $0x150] sm:$0xf] %v821
        %830 = vst [vmem:[#allocation2 + $0x158] sm:$0xf] %v822
        %v831 = vld [vmem:[%s150 + $0x4] sm:$0xff]
        %v832 = vld [vmem:[%s150 + $0xc] sm:$0xff]
        %v833 = vld [vmem:[%s150 + $0x14] sm:$0xf]
        %v837 = vcombine.low %v831, %v831
        %v838 = vcombine.low %v832, %v832
        %v839 = vcombine.low %v833, %v833
        %840 = vrot.lane.b32.xlu0 %v837, 62
        %v841 = vpop.permute.xlu0 %840
        %842 = vrot.lane.b32.xlu0 %v831, 62
        %v843 = vpop.permute.xlu0 %842
        %844 = vrot.lane.b32.xlu0 %v838, 62
        %v845 = vpop.permute.xlu0 %844
        %846 = vrot.lane.b32.xlu0 %v832, 62
        %v847 = vpop.permute.xlu0 %846
        %848 = vrot.lane.b32.xlu0 %v839, 62
        %v849 = vpop.permute.xlu0 %848
        %v850 = vsel %vm756, %v841, %v843
        %v851 = vsel %vm756, %v843, %v845
        %v852 = vsel %vm756, %v845, %v847
        %v853 = vsel %vm756, %v847, %v849
        %858 = vst [vmem:[#allocation2 + $0x140] sm:$0xf0] %v850
        %859 = vst [vmem:[#allocation2 + $0x148] sm:$0xf0] %v851
        %860 = vst [vmem:[#allocation2 + $0x150] sm:$0xf0] %v852
        %861 = vst [vmem:[#allocation2 + $0x158] sm:$0xf0] %v853
        %v862 = vld [vmem:[%s150 + $0x4] sm:$0xff]
        %v863 = vld [vmem:[%s150 + $0xc] sm:$0xff]
        %v864 = vld [vmem:[%s150 + $0x14] sm:$0xf]
        %v868 = vcombine.high %v862, %v862
        %v869 = vcombine.high %v863, %v863
        %870 = vrot.lane.b32.xlu0 %v862, 58
        %v871 = vpop.permute.xlu0 %870
        %872 = vrot.lane.b32.xlu0 %v868, 58
        %v873 = vpop.permute.xlu0 %872
        %874 = vrot.lane.b32.xlu0 %v863, 58
        %v875 = vpop.permute.xlu0 %874
        %876 = vrot.lane.b32.xlu0 %v869, 58
        %v877 = vpop.permute.xlu0 %876
        %878 = vrot.lane.b32.xlu0 %v864, 58
        %v879 = vpop.permute.xlu0 %878
        %v880 = vsel %vm319, %v871, %v873
        %v881 = vsel %vm319, %v873, %v875
        %v882 = vsel %vm319, %v875, %v877
        %v883 = vsel %vm319, %v877, %v879
        %888 = vst [vmem:[#allocation2 + $0x160] sm:$0xf] %v880
        %889 = vst [vmem:[#allocation2 + $0x168] sm:$0xf] %v881
        %890 = vst [vmem:[#allocation2 + $0x170] sm:$0xf] %v882
        %891 = vst [vmem:[#allocation2 + $0x178] sm:$0xf] %v883
        %v892 = vld [vmem:[%s150 + $0x4] sm:$0xff]
        %v893 = vld [vmem:[%s150 + $0xc] sm:$0xff]
        %v894 = vld [vmem:[%s150 + $0x14] sm:$0xf]
        %v898 = vcombine.low %v892, %v892
        %v899 = vcombine.low %v893, %v893
        %v900 = vcombine.low %v894, %v894
        %901 = vrot.lane.b32.xlu0 %v898, 54
        %v902 = vpop.permute.xlu0 %901
        %903 = vrot.lane.b32.xlu0 %v892, 54
        %v904 = vpop.permute.xlu0 %903
        %905 = vrot.lane.b32.xlu0 %v899, 54
        %v906 = vpop.permute.xlu0 %905
        %907 = vrot.lane.b32.xlu0 %v893, 54
        %v908 = vpop.permute.xlu0 %907
        %909 = vrot.lane.b32.xlu0 %v900, 54
        %v910 = vpop.permute.xlu0 %909
        %v911 = vsel %vm818, %v902, %v904
        %v912 = vsel %vm818, %v904, %v906
        %v913 = vsel %vm818, %v906, %v908
        %v914 = vsel %vm818, %v908, %v910
        %919 = vst [vmem:[#allocation2 + $0x160] sm:$0xf0] %v911
        %920 = vst [vmem:[#allocation2 + $0x168] sm:$0xf0] %v912
        %921 = vst [vmem:[#allocation2 + $0x170] sm:$0xf0] %v913
        %922 = vst [vmem:[#allocation2 + $0x178] sm:$0xf0] %v914
        %v923 = vld [vmem:[%s150 + $0x8] sm:$0xff]
        %v924 = vld [vmem:[%s150 + $0x10] sm:$0xff]
        %v925 = vld [vmem:[%s150 + $0x18] sm:$0xf]
        %v929 = vcombine.high %v923, %v923
        %v930 = vcombine.high %v924, %v924
        %931 = vrot.lane.b32.xlu0 %v923, 62
        %v932 = vpop.permute.xlu0 %931
        %933 = vrot.lane.b32.xlu0 %v929, 62
        %v934 = vpop.permute.xlu0 %933
        %935 = vrot.lane.b32.xlu0 %v924, 62
        %v936 = vpop.permute.xlu0 %935
        %937 = vrot.lane.b32.xlu0 %v930, 62
        %v938 = vpop.permute.xlu0 %937
        %939 = vrot.lane.b32.xlu0 %v925, 62
        %v940 = vpop.permute.xlu0 %939
        %v941 = vsel %vm756, %v932, %v934
        %v942 = vsel %vm756, %v934, %v936
        %v943 = vsel %vm756, %v936, %v938
        %v944 = vsel %vm756, %v938, %v940
        %949 = vst [vmem:[#allocation2 + $0x180] sm:$0xf] %v941
        %950 = vst [vmem:[#allocation2 + $0x188] sm:$0xf] %v942
        %951 = vst [vmem:[#allocation2 + $0x190] sm:$0xf] %v943
        %952 = vst [vmem:[#allocation2 + $0x198] sm:$0xf] %v944
        %v953 = vld [vmem:[%s150 + $0x8] sm:$0xff]
        %v954 = vld [vmem:[%s150 + $0x10] sm:$0xff]
        %v955 = vld [vmem:[%s150 + $0x18] sm:$0xf]
        %v959 = vcombine.low %v953, %v953
        %v960 = vcombine.low %v954, %v954
        %v961 = vcombine.low %v955, %v955
        %962 = vrot.lane.b32.xlu0 %v959, 58
        %v963 = vpop.permute.xlu0 %962
        %964 = vrot.lane.b32.xlu0 %v953, 58
        %v965 = vpop.permute.xlu0 %964
        %966 = vrot.lane.b32.xlu0 %v960, 58
        %v967 = vpop.permute.xlu0 %966
        %968 = vrot.lane.b32.xlu0 %v954, 58
        %v969 = vpop.permute.xlu0 %968
        %970 = vrot.lane.b32.xlu0 %v961, 58
        %v971 = vpop.permute.xlu0 %970
        %v972 = vsel %vm319, %v963, %v965
        %v973 = vsel %vm319, %v965, %v967
        %v974 = vsel %vm319, %v967, %v969
        %v975 = vsel %vm319, %v969, %v971
        %980 = vst [vmem:[#allocation2 + $0x180] sm:$0xf0] %v972
        %981 = vst [vmem:[#allocation2 + $0x188] sm:$0xf0] %v973
        %982 = vst [vmem:[#allocation2 + $0x190] sm:$0xf0] %v974
        %983 = vst [vmem:[#allocation2 + $0x198] sm:$0xf0] %v975
        %v984 = vld [vmem:[%s150 + $0x8] sm:$0xff]
        %v985 = vld [vmem:[%s150 + $0x10] sm:$0xff]
        %v986 = vld [vmem:[%s150 + $0x18] sm:$0xf]
        %v990 = vcombine.high %v984, %v984
        %v991 = vcombine.high %v985, %v985
        %992 = vrot.lane.b32.xlu0 %v984, 54
        %v993 = vpop.permute.xlu0 %992
        %994 = vrot.lane.b32.xlu0 %v990, 54
        %v995 = vpop.permute.xlu0 %994
        %996 = vrot.lane.b32.xlu0 %v985, 54
        %v997 = vpop.permute.xlu0 %996
        %998 = vrot.lane.b32.xlu0 %v991, 54
        %v999 = vpop.permute.xlu0 %998
        %1000 = vrot.lane.b32.xlu0 %v986, 54
        %v1001 = vpop.permute.xlu0 %1000
        %v1002 = vsel %vm818, %v993, %v995
        %v1003 = vsel %vm818, %v995, %v997
        %v1004 = vsel %vm818, %v997, %v999
        %v1005 = vsel %vm818, %v999, %v1001
        %1010 = vst [vmem:[#allocation2 + $0x1a0] sm:$0xf] %v1002
        %1011 = vst [vmem:[#allocation2 + $0x1a8] sm:$0xf] %v1003
        %1012 = vst [vmem:[#allocation2 + $0x1b0] sm:$0xf] %v1004
        %1013 = vst [vmem:[#allocation2 + $0x1b8] sm:$0xf] %v1005
        %v1014 = vld [vmem:[%s150] sm:$0xff]
        %v1015 = vld [vmem:[%s150 + $0x8] sm:$0xff]
        %v1018 = vcombine.low %v1014, %v1014
        %v1019 = vcombine.low %v1015, %v1015
        %1022 = vst [vmem:[#allocation2 + $0x1a0] sm:$0xf0] %v1018
        %1023 = vst [vmem:[#allocation2 + $0x1a8] sm:$0xf0] %v1014
        %1024 = vst [vmem:[#allocation2 + $0x1b0] sm:$0xf0] %v1019
        %1025 = vst [vmem:[#allocation2 + $0x1b8] sm:$0xf0] %v1015
        %v1026 = vld [vmem:[%s150] sm:$0xff]
        %v1027 = vld [vmem:[%s150 + $0x8] sm:$0xff]
        %v1028 = vld [vmem:[%s150 + $0x10] sm:$0xf]
        %v1032 = vcombine.high %v1026, %v1026
        %v1033 = vcombine.high %v1027, %v1027
        %1034 = vrot.lane.b32.xlu0 %v1026, 122
        %v1035 = vpop.permute.xlu0 %1034
        %1036 = vrot.lane.b32.xlu0 %v1032, 122
        %v1037 = vpop.permute.xlu0 %1036
        %1038 = vrot.lane.b32.xlu0 %v1027, 122
        %v1039 = vpop.permute.xlu0 %1038
        %1040 = vrot.lane.b32.xlu0 %v1033, 122
        %v1041 = vpop.permute.xlu0 %1040
        %1042 = vrot.lane.b32.xlu0 %v1028, 122
        %v1043 = vpop.permute.xlu0 %1042
        %v1044 = vsel %vm508, %v1035, %v1037
        %v1045 = vsel %vm508, %v1037, %v1039
        %v1046 = vsel %vm508, %v1039, %v1041
        %v1047 = vsel %vm508, %v1041, %v1043
        %1052 = vst [vmem:[#allocation2 + $0x1c0] sm:$0xf] %v1044
        %1053 = vst [vmem:[#allocation2 + $0x1c8] sm:$0xf] %v1045
        %1054 = vst [vmem:[#allocation2 + $0x1d0] sm:$0xf] %v1046
        %1055 = vst [vmem:[#allocation2 + $0x1d8] sm:$0xf] %v1047
        %v1056 = vld [vmem:[%s150] sm:$0xff]
        %v1057 = vld [vmem:[%s150 + $0x8] sm:$0xff]
        %v1058 = vld [vmem:[%s150 + $0x10] sm:$0xf]
        %v1062 = vcombine.low %v1056, %v1056
        %v1063 = vcombine.low %v1057, %v1057
        %v1064 = vcombine.low %v1058, %v1058
        %1065 = vrot.lane.b32.xlu0 %v1062, 116
        %v1066 = vpop.permute.xlu0 %1065
        %1067 = vrot.lane.b32.xlu0 %v1056, 116
        %v1068 = vpop.permute.xlu0 %1067
        %1069 = vrot.lane.b32.xlu0 %v1063, 116
        %v1070 = vpop.permute.xlu0 %1069
        %1071 = vrot.lane.b32.xlu0 %v1057, 116
        %v1072 = vpop.permute.xlu0 %1071
        %1073 = vrot.lane.b32.xlu0 %v1064, 116
        %v1074 = vpop.permute.xlu0 %1073
        %vm1075 = vcmask 949248
        %v1076 = vsel %vm1075, %v1066, %v1068
        %v1077 = vsel %vm1075, %v1068, %v1070
        %v1078 = vsel %vm1075, %v1070, %v1072
        %v1079 = vsel %vm1075, %v1072, %v1074
        %1084 = vst [vmem:[#allocation2 + $0x1c0] sm:$0xf0] %v1076
        %1085 = vst [vmem:[#allocation2 + $0x1c8] sm:$0xf0] %v1077
        %1086 = vst [vmem:[#allocation2 + $0x1d0] sm:$0xf0] %v1078
        %1087 = vst [vmem:[#allocation2 + $0x1d8] sm:$0xf0] %v1079
        %v1088 = vld [vmem:[%s150 + $0x4] sm:$0xff]
        %v1089 = vld [vmem:[%s150 + $0xc] sm:$0xff]
        %v1090 = vld [vmem:[%s150 + $0x14] sm:$0xf]
        %v1094 = vcombine.high %v1088, %v1088
        %v1095 = vcombine.high %v1089, %v1089
        %1096 = vrot.lane.b32.xlu0 %v1088, 64
        %v1097 = vpop.permute.xlu0 %1096
        %1098 = vrot.lane.b32.xlu0 %v1094, 64
        %v1099 = vpop.permute.xlu0 %1098
        %1100 = vrot.lane.b32.xlu0 %v1089, 64
        %v1101 = vpop.permute.xlu0 %1100
        %1102 = vrot.lane.b32.xlu0 %v1095, 64
        %v1103 = vpop.permute.xlu0 %1102
        %1104 = vrot.lane.b32.xlu0 %v1090, 64
        %v1105 = vpop.permute.xlu0 %1104
        %vm1106 = vcmask 523264
        %v1107 = vsel %vm1106, %v1097, %v1099
        %v1108 = vsel %vm1106, %v1099, %v1101
        %v1109 = vsel %vm1106, %v1101, %v1103
        %v1110 = vsel %vm1106, %v1103, %v1105
        %1115 = vst [vmem:[#allocation2 + $0x1e0] sm:$0xf] %v1107
        %1116 = vst [vmem:[#allocation2 + $0x1e8] sm:$0xf] %v1108
        %1117 = vst [vmem:[#allocation2 + $0x1f0] sm:$0xf] %v1109
        %1118 = vst [vmem:[#allocation2 + $0x1f8] sm:$0xf] %v1110
        %v1119 = vld [vmem:[%s150 + $0x4] sm:$0xff]
        %v1120 = vld [vmem:[%s150 + $0xc] sm:$0xff]
        %v1121 = vld [vmem:[%s150 + $0x14] sm:$0xf]
        %v1125 = vcombine.low %v1119, %v1119
        %v1126 = vcombine.low %v1120, %v1120
        %v1127 = vcombine.low %v1121, %v1121
        %1128 = vrot.lane.b32.xlu0 %v1125, 58
        %v1129 = vpop.permute.xlu0 %1128
        %1130 = vrot.lane.b32.xlu0 %v1119, 58
        %v1131 = vpop.permute.xlu0 %1130
        %1132 = vrot.lane.b32.xlu0 %v1126, 58
        %v1133 = vpop.permute.xlu0 %1132
        %1134 = vrot.lane.b32.xlu0 %v1120, 58
        %v1135 = vpop.permute.xlu0 %1134
        %1136 = vrot.lane.b32.xlu0 %v1127, 58
        %v1137 = vpop.permute.xlu0 %1136
        %v1138 = vsel %vm319, %v1129, %v1131
        %v1139 = vsel %vm319, %v1131, %v1133
        %v1140 = vsel %vm319, %v1133, %v1135
        %v1141 = vsel %vm319, %v1135, %v1137
        %1146 = vst [vmem:[#allocation2 + $0x1e0] sm:$0xf0] %v1138
        %1147 = vst [vmem:[#allocation2 + $0x1e8] sm:$0xf0] %v1139
        %1148 = vst [vmem:[#allocation2 + $0x1f0] sm:$0xf0] %v1140
        %1149 = vst [vmem:[#allocation2 + $0x1f8] sm:$0xf0] %v1141
        %v1150 = vld [vmem:[%s150 + $0x4] sm:$0xff]
        %v1151 = vld [vmem:[%s150 + $0xc] sm:$0xff]
        %v1152 = vld [vmem:[%s150 + $0x14] sm:$0xf]
        %v1156 = vcombine.high %v1150, %v1150
        %v1157 = vcombine.high %v1151, %v1151
        %1158 = vrot.lane.b32.xlu0 %v1150, 52
        %v1159 = vpop.permute.xlu0 %1158
        %1160 = vrot.lane.b32.xlu0 %v1156, 52
        %v1161 = vpop.permute.xlu0 %1160
        %1162 = vrot.lane.b32.xlu0 %v1151, 52
        %v1163 = vpop.permute.xlu0 %1162
        %1164 = vrot.lane.b32.xlu0 %v1157, 52
        %v1165 = vpop.permute.xlu0 %1164
        %1166 = vrot.lane.b32.xlu0 %v1152, 52
        %v1167 = vpop.permute.xlu0 %1166
        %vm1168 = vcmask 424960
        %v1169 = vsel %vm1168, %v1159, %v1161
        %v1170 = vsel %vm1168, %v1161, %v1163
        %v1171 = vsel %vm1168, %v1163, %v1165
        %v1172 = vsel %vm1168, %v1165, %v1167
        %1177 = vst [vmem:[#allocation2 + $0x200] sm:$0xf] %v1169
        %1178 = vst [vmem:[#allocation2 + $0x208] sm:$0xf] %v1170
        %1179 = vst [vmem:[#allocation2 + $0x210] sm:$0xf] %v1171
        %1180 = vst [vmem:[#allocation2 + $0x218] sm:$0xf] %v1172
        %v1181 = vld [vmem:[%s150 + $0xc] sm:$0xff]
        %v1182 = vld [vmem:[%s150 + $0x14] sm:$0xff]
        %v1185 = vcombine.low %v1181, %v1181
        %v1186 = vcombine.low %v1182, %v1182
        %1189 = vst [vmem:[#allocation2 + $0x200] sm:$0xf0] %v1185
        %1190 = vst [vmem:[#allocation2 + $0x208] sm:$0xf0] %v1181
        %1191 = vst [vmem:[#allocation2 + $0x210] sm:$0xf0] %v1186
        %1192 = vst [vmem:[#allocation2 + $0x218] sm:$0xf0] %v1182
        %v1193 = vld [vmem:[%s150 + $0xc] sm:$0xff]
        %v1194 = vld [vmem:[%s150 + $0x14] sm:$0xff]
        %v1195 = vld [vmem:[%s150 + $0x1c] sm:$0xf]
        %v1199 = vcombine.high %v1193, %v1193
        %v1200 = vcombine.high %v1194, %v1194
        %1201 = vrot.lane.b32.xlu0 %v1193, 122
        %v1202 = vpop.permute.xlu0 %1201
        %1203 = vrot.lane.b32.xlu0 %v1199, 122
        %v1204 = vpop.permute.xlu0 %1203
        %1205 = vrot.lane.b32.xlu0 %v1194, 122
        %v1206 = vpop.permute.xlu0 %1205
        %1207 = vrot.lane.b32.xlu0 %v1200, 122
        %v1208 = vpop.permute.xlu0 %1207
        %1209 = vrot.lane.b32.xlu0 %v1195, 122
        %v1210 = vpop.permute.xlu0 %1209
        %v1211 = vsel %vm508, %v1202, %v1204
        %v1212 = vsel %vm508, %v1204, %v1206
        %v1213 = vsel %vm508, %v1206, %v1208
        %v1214 = vsel %vm508, %v1208, %v1210
        %1219 = vst [vmem:[#allocation2 + $0x220] sm:$0xf] %v1211
        %1220 = vst [vmem:[#allocation2 + $0x228] sm:$0xf] %v1212
        %1221 = vst [vmem:[#allocation2 + $0x230] sm:$0xf] %v1213
        %1222 = vst [vmem:[#allocation2 + $0x238] sm:$0xf] %v1214
        %v1223 = vld [vmem:[%s150 + $0xc] sm:$0xff]
        %v1224 = vld [vmem:[%s150 + $0x14] sm:$0xff]
        %v1225 = vld [vmem:[%s150 + $0x1c] sm:$0xf]
        %v1229 = vcombine.low %v1223, %v1223
        %v1230 = vcombine.low %v1224, %v1224
        %v1231 = vcombine.low %v1225, %v1225
        %1232 = vrot.lane.b32.xlu0 %v1229, 116
        %v1233 = vpop.permute.xlu0 %1232
        %1234 = vrot.lane.b32.xlu0 %v1223, 116
        %v1235 = vpop.permute.xlu0 %1234
        %1236 = vrot.lane.b32.xlu0 %v1230, 116
        %v1237 = vpop.permute.xlu0 %1236
        %1238 = vrot.lane.b32.xlu0 %v1224, 116
        %v1239 = vpop.permute.xlu0 %1238
        %1240 = vrot.lane.b32.xlu0 %v1231, 116
        %v1241 = vpop.permute.xlu0 %1240
        %v1242 = vsel %vm1075, %v1233, %v1235
        %v1243 = vsel %vm1075, %v1235, %v1237
        %v1244 = vsel %vm1075, %v1237, %v1239
        %v1245 = vsel %vm1075, %v1239, %v1241
        %1250 = vst [vmem:[#allocation2 + $0x220] sm:$0xf0] %v1242
        %1251 = vst [vmem:[#allocation2 + $0x228] sm:$0xf0] %v1243
        %1252 = vst [vmem:[#allocation2 + $0x230] sm:$0xf0] %v1244
        %1253 = vst [vmem:[#allocation2 + $0x238] sm:$0xf0] %v1245
        %v1254 = vld [vmem:[#allocation6] sm:$0xff]
        %v1255 = vld [vmem:[#allocation6 + $0x8] sm:$0xff]
        %v1256 = vld [vmem:[#allocation6 + $0x10] sm:$0xff]
        %v1257 = vld [vmem:[#allocation6 + $0x18] sm:$0xff]
        %v1258 = vld [vmem:[#allocation6 + $0x20] sm:$0xff]
        %v1259 = vld [vmem:[#allocation6 + $0x28] sm:$0xff]
        %v1260 = vld [vmem:[#allocation6 + $0x30] sm:$0xff]
        %v1261 = vld [vmem:[#allocation6 + $0x38] sm:$0xff]
        %v1262 = vld [vmem:[#allocation6 + $0x40] sm:$0xff]
        %v1263 = vld [vmem:[#allocation6 + $0x48] sm:$0xff]
        %v1264 = vld [vmem:[#allocation6 + $0x50] sm:$0xff]
        %v1265 = vld [vmem:[#allocation6 + $0x58] sm:$0xff]
        %v1266 = vld [vmem:[#allocation6 + $0x60] sm:$0xff]
        %v1267 = vld [vmem:[#allocation6 + $0x68] sm:$0xff]
        %v1268 = vld [vmem:[#allocation6 + $0x70] sm:$0xff]
        %v1269 = vld [vmem:[#allocation6 + $0x78] sm:$0xff]
        %v1270 = vld [vmem:[#allocation2] sm:$0xff]
        %v1271 = vld [vmem:[#allocation2 + $0x8] sm:$0xff]
        %v1272 = vld [vmem:[#allocation2 + $0x10] sm:$0xff]
        %v1273 = vld [vmem:[#allocation2 + $0x18] sm:$0xff]
        %v1274 = vld [vmem:[#allocation2 + $0x20] sm:$0xff]
        %v1275 = vld [vmem:[#allocation2 + $0x28] sm:$0xff]
        %v1276 = vld [vmem:[#allocation2 + $0x30] sm:$0xff]
        %v1277 = vld [vmem:[#allocation2 + $0x38] sm:$0xff]
        %v1278 = vld [vmem:[#allocation2 + $0x40] sm:$0xff]
        %v1279 = vld [vmem:[#allocation2 + $0x48] sm:$0xff]
        %v1280 = vld [vmem:[#allocation2 + $0x50] sm:$0xff]
        %v1281 = vld [vmem:[#allocation2 + $0x58] sm:$0xff]
        %v1282 = vld [vmem:[#allocation2 + $0x60] sm:$0xff]
        %v1283 = vld [vmem:[#allocation2 + $0x68] sm:$0xff]
        %v1284 = vld [vmem:[#allocation2 + $0x70] sm:$0xff]
        %v1285 = vld [vmem:[#allocation2 + $0x78] sm:$0xff]
        %v1286 = vld [vmem:[#allocation2 + $0x80] sm:$0xff]
        %v1287 = vld [vmem:[#allocation2 + $0x88] sm:$0xff]
        %v1288 = vld [vmem:[#allocation2 + $0x90] sm:$0xff]
        %v1289 = vld [vmem:[#allocation2 + $0x98] sm:$0xff]
        %v1290 = vld [vmem:[#allocation2 + $0xa0] sm:$0xff]
        %v1291 = vld [vmem:[#allocation2 + $0xa8] sm:$0xff]
        %v1292 = vld [vmem:[#allocation2 + $0xb0] sm:$0xff]
        %v1293 = vld [vmem:[#allocation2 + $0xb8] sm:$0xff]
        %v1294 = vld [vmem:[#allocation2 + $0xc0] sm:$0xff]
        %v1295 = vld [vmem:[#allocation2 + $0xc8] sm:$0xff]
        %v1296 = vld [vmem:[#allocation2 + $0xd0] sm:$0xff]
        %v1297 = vld [vmem:[#allocation2 + $0xd8] sm:$0xff]
        %v1298 = vld [vmem:[#allocation2 + $0xe0] sm:$0xff]
        %v1299 = vld [vmem:[#allocation2 + $0xe8] sm:$0xff]
        %v1300 = vld [vmem:[#allocation2 + $0xf0] sm:$0xff]
        %v1301 = vld [vmem:[#allocation2 + $0xf8] sm:$0xff]
        %v1302 = vld [vmem:[#allocation2 + $0x100] sm:$0xff]
        %v1303 = vld [vmem:[#allocation2 + $0x108] sm:$0xff]
        %v1304 = vld [vmem:[#allocation2 + $0x110] sm:$0xff]
        %v1305 = vld [vmem:[#allocation2 + $0x118] sm:$0xff]
        %v1306 = vld [vmem:[#allocation2 + $0x120] sm:$0xff]
        %v1307 = vld [vmem:[#allocation2 + $0x128] sm:$0xff]
        %v1308 = vld [vmem:[#allocation2 + $0x130] sm:$0xff]
        %v1309 = vld [vmem:[#allocation2 + $0x138] sm:$0xff]
        %v1310 = vld [vmem:[#allocation2 + $0x140] sm:$0xff]
        %v1311 = vld [vmem:[#allocation2 + $0x148] sm:$0xff]
        %v1312 = vld [vmem:[#allocation2 + $0x150] sm:$0xff]
        %v1313 = vld [vmem:[#allocation2 + $0x158] sm:$0xff]
        %v1314 = vld [vmem:[#allocation2 + $0x160] sm:$0xff]
        %v1315 = vld [vmem:[#allocation2 + $0x168] sm:$0xff]
        %v1316 = vld [vmem:[#allocation2 + $0x170] sm:$0xff]
        %v1317 = vld [vmem:[#allocation2 + $0x178] sm:$0xff]
        %v1318 = vld [vmem:[#allocation2 + $0x180] sm:$0xff]
        %v1319 = vld [vmem:[#allocation2 + $0x188] sm:$0xff]
        %v1320 = vld [vmem:[#allocation2 + $0x190] sm:$0xff]
        %v1321 = vld [vmem:[#allocation2 + $0x198] sm:$0xff]
        %v1322 = vld [vmem:[#allocation2 + $0x1a0] sm:$0xff]
        %v1323 = vld [vmem:[#allocation2 + $0x1a8] sm:$0xff]
        %v1324 = vld [vmem:[#allocation2 + $0x1b0] sm:$0xff]
        %v1325 = vld [vmem:[#allocation2 + $0x1b8] sm:$0xff]
        %v1326 = vld [vmem:[#allocation2 + $0x1c0] sm:$0xff]
        %v1327 = vld [vmem:[#allocation2 + $0x1c8] sm:$0xff]
        %v1328 = vld [vmem:[#allocation2 + $0x1d0] sm:$0xff]
        %v1329 = vld [vmem:[#allocation2 + $0x1d8] sm:$0xff]
        %v1330 = vld [vmem:[#allocation2 + $0x1e0] sm:$0xff]
        %v1331 = vld [vmem:[#allocation2 + $0x1e8] sm:$0xff]
        %v1332 = vld [vmem:[#allocation2 + $0x1f0] sm:$0xff]
        %v1333 = vld [vmem:[#allocation2 + $0x1f8] sm:$0xff]
        %v1334 = vld [vmem:[#allocation2 + $0x200] sm:$0xff]
        %v1335 = vld [vmem:[#allocation2 + $0x208] sm:$0xff]
        %v1336 = vld [vmem:[#allocation2 + $0x210] sm:$0xff]
        %v1337 = vld [vmem:[#allocation2 + $0x218] sm:$0xff]
        %v1338 = vld [vmem:[#allocation2 + $0x220] sm:$0xff]
        %v1339 = vld [vmem:[#allocation2 + $0x228] sm:$0xff]
        %v1340 = vld [vmem:[#allocation2 + $0x230] sm:$0xff]
        %v1341 = vld [vmem:[#allocation2 + $0x238] sm:$0xff]
        %vm1342 = vcmask 130048
        %v1344 = vsel %vm1342, %v1255, 0
        %v1347 = vsel %vm1342, %v1257, 0
        %v1350 = vsel %vm1342, %v1259, 0
        %v1353 = vsel %vm1342, %v1261, 0
        %v1356 = vsel %vm1342, %v1263, 0
        %v1359 = vsel %vm1342, %v1265, 0
        %v1362 = vsel %vm1342, %v1267, 0
        %v1365 = vsel %vm1342, %v1269, 0
        %1367 = vmatprep.subr.mxu0 %v1331
        %1368 = vmatpush1.msra.mxu0 %v1330
        %1369 = vmatprep.subr.mxu0 %v1327
        %1370 = vmatpush1.msra.mxu0 %v1326
        %1371 = vmatprep.subr.mxu0 %v1323
        %1372 = vmatpush1.msra.mxu0 %v1322
        %1373 = vmatprep.subr.mxu0 %v1319
        %1374 = vmatpush1.msra.mxu0 %v1318
        %1375 = vmatprep.subr.mxu0 %v1315
        %1376 = vmatpush1.msra.mxu0 %v1314
        %1377 = vmatprep.subr.mxu0 %v1311
        %1378 = vmatpush1.msra.mxu0 %v1310
        %1379 = vmatprep.subr.mxu0 %v1307
        %1380 = vmatpush1.msra.mxu0 %v1306
        %1381 = vmatprep.subr.mxu0 %v1303
        %1382 = vmatpush1.msra.mxu0 %v1302
        %1383 = vmatprep.subr.mxu0 %v1299
        %1384 = vmatpush1.msra.mxu0 %v1298
        %1385 = vmatprep.subr.mxu0 %v1295
        %1386 = vmatpush1.msra.mxu0 %v1294
        %1387 = vmatprep.subr.mxu0 %v1291
        %1388 = vmatpush1.msra.mxu0 %v1290
        %1389 = vmatprep.subr.mxu0 %v1287
        %1390 = vmatpush1.msra.mxu0 %v1286
        %1391 = vmatprep.subr.mxu0 %v1283
        %1392 = vmatpush1.msra.mxu0 %v1282
        %1393 = vmatprep.subr.mxu0 %v1279
        %1394 = vmatpush1.msra.mxu0 %v1278
        %1395 = vmatprep.subr.mxu0 %v1275
        %1396 = vmatpush1.msra.mxu0 %v1274
        %1397 = vmatprep.subr.mxu0 %v1271
        %1398 = vmatpush1.msra.mxu0 %v1270
        %1399 = vmatprep.subr.mxu0 0.0
        %1400 = vmatpush2.msra.mxu0 0.0
        %1401 = vmatprep.subr.mxu0 0.0
        %1402 = vmatpush2.msra.mxu0 0.0
        %1403 = vmatprep.subr.mxu0 0.0
        %1404 = vmatpush2.msra.mxu0 0.0
        %1405 = vmatprep.subr.mxu0 0.0
        %1406 = vmatpush2.msra.mxu0 0.0
        %1407 = vmatprep.subr.mxu0 0.0
        %1408 = vmatpush2.msra.mxu0 0.0
        %1409 = vmatprep.subr.mxu0 0.0
        %1410 = vmatpush2.msra.mxu0 0.0
        %1411 = vmatprep.subr.mxu0 0.0
        %1412 = vmatpush2.msra.mxu0 0.0
        %1413 = vmatprep.subr.mxu0 0.0
        %1414 = vmatpush2.msra.mxu0 0.0
        %1415 = vmatprep.subr.mxu0 0.0
        %1416 = vmatpush2.msra.mxu0 0.0
        %1417 = vmatprep.subr.mxu0 0.0
        %1418 = vmatpush2.msra.mxu0 0.0
        %1419 = vmatprep.subr.mxu0 0.0
        %1420 = vmatpush2.msra.mxu0 0.0
        %1421 = vmatprep.subr.mxu0 0.0
        %1422 = vmatpush2.msra.mxu0 0.0
        %1423 = vmatprep.subr.mxu0 0.0
        %1424 = vmatpush2.msra.mxu0 0.0
        %1425 = vmatprep.subr.mxu0 0.0
        %1426 = vmatpush2.msra.mxu0 0.0
        %1427 = vmatprep.subr.mxu0 %v1339
        %1428 = vmatpush2.msra.mxu0 %v1338
        %1429 = vmatprep.subr.mxu0 %v1335
        %1430 = vmatpush2.msra.mxu0 %v1334
        %1431 = vmatprep.mubr.f32.mxu0 %v1344
        %1432 = vmatmul.mubr.f32.gmra.mxu0 %v1254
        %v1433 = vpop.f32.mrf.mxu0
        %v1434 = vadd.f32 0.0, %v1433
        %v1435 = vpop.f32.mrf.mxu0
        %v1436 = vadd.f32 0.0, %v1435
        %1437 = vmatprep.mubr.f32.mxu0 %v1347
        %1438 = vmatmul.mubr.f32.gmra.mxu0 %v1256
        %v1439 = vpop.f32.mrf.mxu0
        %v1440 = vadd.f32 0.0, %v1439
        %v1441 = vpop.f32.mrf.mxu0
        %v1442 = vadd.f32 0.0, %v1441
        %1443 = vmatprep.mubr.f32.mxu0 %v1350
        %1444 = vmatmul.mubr.f32.gmra.mxu0 %v1258
        %v1445 = vpop.f32.mrf.mxu0
        %v1446 = vadd.f32 0.0, %v1445
        %v1447 = vpop.f32.mrf.mxu0
        %v1448 = vadd.f32 0.0, %v1447
        %1449 = vmatprep.mubr.f32.mxu0 %v1353
        %1450 = vmatmul.mubr.f32.gmra.mxu0 %v1260
        %v1451 = vpop.f32.mrf.mxu0
        %v1452 = vadd.f32 0.0, %v1451
        %v1453 = vpop.f32.mrf.mxu0
        %v1454 = vadd.f32 0.0, %v1453
        %1455 = vmatprep.mubr.f32.mxu0 %v1356
        %1456 = vmatmul.mubr.f32.gmra.mxu0 %v1262
        %v1457 = vpop.f32.mrf.mxu0
        %v1458 = vadd.f32 0.0, %v1457
        %v1459 = vpop.f32.mrf.mxu0
        %v1460 = vadd.f32 0.0, %v1459
        %1461 = vmatprep.mubr.f32.mxu0 %v1359
        %1462 = vmatmul.mubr.f32.gmra.mxu0 %v1264
        %v1463 = vpop.f32.mrf.mxu0
        %v1464 = vadd.f32 0.0, %v1463
        %v1465 = vpop.f32.mrf.mxu0
        %v1466 = vadd.f32 0.0, %v1465
        %1467 = vmatprep.mubr.f32.mxu0 %v1362
        %1468 = vmatmul.mubr.f32.gmra.mxu0 %v1266
        %v1469 = vpop.f32.mrf.mxu0
        %v1470 = vadd.f32 0.0, %v1469
        %v1471 = vpop.f32.mrf.mxu0
        %v1472 = vadd.f32 0.0, %v1471
        %1473 = vmatprep.mubr.f32.mxu0 %v1365
        %1474 = vmatmul.mubr.f32.gmra.mxu0 %v1268
        %v1475 = vpop.f32.mrf.mxu0
        %v1476 = vadd.f32 0.0, %v1475
        %v1477 = vpop.f32.mrf.mxu0
        %v1478 = vadd.f32 0.0, %v1477
        %1479 = vdwg.mxu0
        %1480 = vmatprep.subr.mxu0 %v1333
        %1481 = vmatpush1.msra.mxu0 %v1332
        %1482 = vmatprep.subr.mxu0 %v1329
        %1483 = vmatpush1.msra.mxu0 %v1328
        %1484 = vmatprep.subr.mxu0 %v1325
        %1485 = vmatpush1.msra.mxu0 %v1324
        %1486 = vmatprep.subr.mxu0 %v1321
        %1487 = vmatpush1.msra.mxu0 %v1320
        %1488 = vmatprep.subr.mxu0 %v1317
        %1489 = vmatpush1.msra.mxu0 %v1316
        %1490 = vmatprep.subr.mxu0 %v1313
        %1491 = vmatpush1.msra.mxu0 %v1312
        %1492 = vmatprep.subr.mxu0 %v1309
        %1493 = vmatpush1.msra.mxu0 %v1308
        %1494 = vmatprep.subr.mxu0 %v1305
        %1495 = vmatpush1.msra.mxu0 %v1304
        %1496 = vmatprep.subr.mxu0 %v1301
        %1497 = vmatpush1.msra.mxu0 %v1300
        %1498 = vmatprep.subr.mxu0 %v1297
        %1499 = vmatpush1.msra.mxu0 %v1296
        %1500 = vmatprep.subr.mxu0 %v1293
        %1501 = vmatpush1.msra.mxu0 %v1292
        %1502 = vmatprep.subr.mxu0 %v1289
        %1503 = vmatpush1.msra.mxu0 %v1288
        %1504 = vmatprep.subr.mxu0 %v1285
        %1505 = vmatpush1.msra.mxu0 %v1284
        %1506 = vmatprep.subr.mxu0 %v1281
        %1507 = vmatpush1.msra.mxu0 %v1280
        %1508 = vmatprep.subr.mxu0 %v1277
        %1509 = vmatpush1.msra.mxu0 %v1276
        %1510 = vmatprep.subr.mxu0 %v1273
        %1511 = vmatpush1.msra.mxu0 %v1272
        %1512 = vmatprep.subr.mxu0 0.0
        %1513 = vmatpush2.msra.mxu0 0.0
        %1514 = vmatprep.subr.mxu0 0.0
        %1515 = vmatpush2.msra.mxu0 0.0
        %1516 = vmatprep.subr.mxu0 0.0
        %1517 = vmatpush2.msra.mxu0 0.0
        %1518 = vmatprep.subr.mxu0 0.0
        %1519 = vmatpush2.msra.mxu0 0.0
        %1520 = vmatprep.subr.mxu0 0.0
        %1521 = vmatpush2.msra.mxu0 0.0
        %1522 = vmatprep.subr.mxu0 0.0
        %1523 = vmatpush2.msra.mxu0 0.0
        %1524 = vmatprep.subr.mxu0 0.0
        %1525 = vmatpush2.msra.mxu0 0.0
        %1526 = vmatprep.subr.mxu0 0.0
        %1527 = vmatpush2.msra.mxu0 0.0
        %1528 = vmatprep.subr.mxu0 0.0
        %1529 = vmatpush2.msra.mxu0 0.0
        %1530 = vmatprep.subr.mxu0 0.0
        %1531 = vmatpush2.msra.mxu0 0.0
        %1532 = vmatprep.subr.mxu0 0.0
        %1533 = vmatpush2.msra.mxu0 0.0
        %1534 = vmatprep.subr.mxu0 0.0
        %1535 = vmatpush2.msra.mxu0 0.0
        %1536 = vmatprep.subr.mxu0 0.0
        %1537 = vmatpush2.msra.mxu0 0.0
        %1538 = vmatprep.subr.mxu0 0.0
        %1539 = vmatpush2.msra.mxu0 0.0
        %1540 = vmatprep.subr.mxu0 %v1341
        %1541 = vmatpush2.msra.mxu0 %v1340
        %1542 = vmatprep.subr.mxu0 %v1337
        %1543 = vmatpush2.msra.mxu0 %v1336
        %1544 = vmatprep.mubr.f32.mxu0 %v1344
        %1545 = vmatmul.mubr.f32.gmra.mxu0 %v1254
        %v1546 = vpop.f32.mrf.mxu0
        %v1547 = vadd.f32 0.0, %v1546
        %v1548 = vpop.f32.mrf.mxu0
        %v1549 = vadd.f32 0.0, %v1548
        %1550 = vmatprep.mubr.f32.mxu0 %v1347
        %1551 = vmatmul.mubr.f32.gmra.mxu0 %v1256
        %v1552 = vpop.f32.mrf.mxu0
        %v1553 = vadd.f32 0.0, %v1552
        %v1554 = vpop.f32.mrf.mxu0
        %v1555 = vadd.f32 0.0, %v1554
        %1556 = vmatprep.mubr.f32.mxu0 %v1350
        %1557 = vmatmul.mubr.f32.gmra.mxu0 %v1258
        %v1558 = vpop.f32.mrf.mxu0
        %v1559 = vadd.f32 0.0, %v1558
        %v1560 = vpop.f32.mrf.mxu0
        %v1561 = vadd.f32 0.0, %v1560
        %1562 = vmatprep.mubr.f32.mxu0 %v1353
        %1563 = vmatmul.mubr.f32.gmra.mxu0 %v1260
        %v1564 = vpop.f32.mrf.mxu0
        %v1565 = vadd.f32 0.0, %v1564
        %v1566 = vpop.f32.mrf.mxu0
        %v1567 = vadd.f32 0.0, %v1566
        %1568 = vmatprep.mubr.f32.mxu0 %v1356
        %1569 = vmatmul.mubr.f32.gmra.mxu0 %v1262
        %v1570 = vpop.f32.mrf.mxu0
        %v1571 = vadd.f32 0.0, %v1570
        %v1572 = vpop.f32.mrf.mxu0
        %v1573 = vadd.f32 0.0, %v1572
        %1574 = vmatprep.mubr.f32.mxu0 %v1359
        %1575 = vmatmul.mubr.f32.gmra.mxu0 %v1264
        %v1576 = vpop.f32.mrf.mxu0
        %v1577 = vadd.f32 0.0, %v1576
        %v1578 = vpop.f32.mrf.mxu0
        %v1579 = vadd.f32 0.0, %v1578
        %1580 = vmatprep.mubr.f32.mxu0 %v1362
        %1581 = vmatmul.mubr.f32.gmra.mxu0 %v1266
        %v1582 = vpop.f32.mrf.mxu0
        %v1583 = vadd.f32 0.0, %v1582
        %v1584 = vpop.f32.mrf.mxu0
        %v1585 = vadd.f32 0.0, %v1584
        %1586 = vmatprep.mubr.f32.mxu0 %v1365
        %1587 = vmatmul.mubr.f32.gmra.mxu0 %v1268
        %v1588 = vpop.f32.mrf.mxu0
        %v1589 = vadd.f32 0.0, %v1588
        %v1590 = vpop.f32.mrf.mxu0
        %v1591 = vadd.f32 0.0, %v1590
        %1592 = vdwg.mxu0
        %1593 = vst [vmem:[%s174] sm:$0xff] %v1434
        %1594 = vst [vmem:[%s174 + $0x8] sm:$0xff] %v1436
        %1595 = vst [vmem:[%s174 + $0x10] sm:$0xff] %v1547
        %1596 = vst [vmem:[%s174 + $0x18] sm:$0xff] %v1549
        %1597 = vst [vmem:[%s174 + $0x20] sm:$0xff] %v1440
        %1598 = vst [vmem:[%s174 + $0x28] sm:$0xff] %v1442
        %1599 = vst [vmem:[%s174 + $0x30] sm:$0xff] %v1553
        %1600 = vst [vmem:[%s174 + $0x38] sm:$0xff] %v1555
        %1601 = vst [vmem:[%s174 + $0x40] sm:$0xff] %v1446
        %1602 = vst [vmem:[%s174 + $0x48] sm:$0xff] %v1448
        %1603 = vst [vmem:[%s174 + $0x50] sm:$0xff] %v1559
        %1604 = vst [vmem:[%s174 + $0x58] sm:$0xff] %v1561
        %1605 = vst [vmem:[%s174 + $0x60] sm:$0xff] %v1452
        %1606 = vst [vmem:[%s174 + $0x68] sm:$0xff] %v1454
        %1607 = vst [vmem:[%s174 + $0x70] sm:$0xff] %v1565
        %1608 = vst [vmem:[%s174 + $0x78] sm:$0xff] %v1567
        %1609 = vst [vmem:[%s174 + $0x80] sm:$0xff] %v1458
        %1610 = vst [vmem:[%s174 + $0x88] sm:$0xff] %v1460
        %1611 = vst [vmem:[%s174 + $0x90] sm:$0xff] %v1571
        %1612 = vst [vmem:[%s174 + $0x98] sm:$0xff] %v1573
        %1613 = vst [vmem:[%s174 + $0xa0] sm:$0xff] %v1464
        %1614 = vst [vmem:[%s174 + $0xa8] sm:$0xff] %v1466
        %1615 = vst [vmem:[%s174 + $0xb0] sm:$0xff] %v1577
        %1616 = vst [vmem:[%s174 + $0xb8] sm:$0xff] %v1579
        %1617 = vst [vmem:[%s174 + $0xc0] sm:$0xff] %v1470
        %1618 = vst [vmem:[%s174 + $0xc8] sm:$0xff] %v1472
        %1619 = vst [vmem:[%s174 + $0xd0] sm:$0xff] %v1583
        %1620 = vst [vmem:[%s174 + $0xd8] sm:$0xff] %v1585
        %1621 = vst [vmem:[%s174 + $0xe0] sm:$0xff] %v1476
        %1622 = vst [vmem:[%s174 + $0xe8] sm:$0xff] %v1478
        %1623 = vst [vmem:[%s174 + $0xf0] sm:$0xff] %v1589
        %1624 = vst [vmem:[%s174 + $0xf8] sm:$0xff] %v1591
        %s1625 = sand.u32 %s75, 1
        %s1626 = scalar_lea.sflag [#allocation5], %s1625
        %s1627 = sand.u32 %s75, 1
        %s1628 = smul.addr %s1627, 256
        %s1629 = scalar_lea.vmem [#allocation8], %s1628
        // Predicated region
        $region37: #{tpu_custom_call.1} parent=27 // pred_check
          %p1630 = pneg %p85
        $region38: #{tpu_custom_call.1} parent=27 // pred_check_branch
          %1632 = sbr.rel (%p1630) target = $region40
        $region39: #{tpu_custom_call.1} parent=27 // pred_region
          %s1634 = ssub.s32 4096, 4096
          %1635 = vsyncadd %s1626, %s1634
          %s1636 = smul.addr %s20, 32
          %s1637 = smul.addr %s1636, 128
          %s1638 = scalar_lea.hbm %s2, %s1637
          %s1639 = sshll.u32 %s1629, 4
          %s1640 = int_to_ptr.vmem [resolvable:$true] %s1639
          %1645 = dma.vmem_to_hbm [thread:$0]  %s1640, 4096, %s1638, %s1626, 512, 512, 32
        $region40: #{tpu_custom_call.1} parent=27 // pred_fallthru
          _
      $region28: #{tpu_custom_call.1} parent=5 // pred_fallthru
        _
      %p1646 = scmp.le.s32.totalorder 2, %s15
      // Predicated region
      $region41: #{tpu_custom_call.1} parent=5 // pred_check
        %p1647 = pneg %p1646
      $region42: #{tpu_custom_call.1} parent=5 // pred_check_branch
        %1649 = sbr.rel (%p1647) target = $region44
      $region43: #{tpu_custom_call.1} parent=5 // pred_region
        %s1650 = ssub.s32 %s15, 2
        // Predicated region
        $region45: #{tpu_custom_call.1} parent=43 // pred_check
          %p1651 = pneg %p91
        $region46: #{tpu_custom_call.1} parent=43 // pred_check_branch
          %1653 = sbr.rel (%p1651) target = $region48
        $region47: #{tpu_custom_call.1} parent=43 // pred_region
          %s1654 = sand.u32 %s76, 1
          %s1655 = scalar_lea.sflag [#allocation5], %s1654
          %s1656 = sand.u32 %s76, 1
          %s1657 = smul.addr %s1656, 256
          %s1658 = scalar_lea.vmem [#allocation8], %s1657
          %1659 = dma.done %s1655, 4096
        $region48: #{tpu_custom_call.1} parent=43 // pred_fallthru
          _
      $region44: #{tpu_custom_call.1} parent=5 // pred_fallthru
        _
    $region6: #{tpu_custom_call.1} parent=1 // loop_footer
      %s19 = sadd.s32 1, %s15
    $region7: #{tpu_custom_call.1} parent=1 // loop_footer_branch
      %14 = sbr.rel target = $region3
    $region8: #{tpu_custom_call.1} parent=1 // loop_exit
      _
    %1660 = vsyncpa [#allocation4], 1
    %s1661 = scalar_lea.sflag [#allocation4], 1
    %1662 = vsyncpa %s1661, 1
    %1663 = vsyncpa [#allocation7], 1
    %1664 = vsyncpa [#allocation5], 1
    %s1665 = scalar_lea.sflag [#allocation5], 1
    %1666 = vsyncpa %s1665, 1

</llo_original>
